<compile_context>
chip_gen: v7x
topology: tpu7x:2x2x1
jax: 0.10.0
libtpu: 0.0.40
codegen_flags: <defaults>
</compile_context>

<pallas_src>
import functools
import math

import jax
import jax.numpy as jnp
from jax.experimental import pallas as pl
from jax.experimental.pallas import tpu as pltpu

# ---- small model config consistent with the module's ModelArgs ----
VOCAB = 256
DIM = 64
N_HEADS = 4
HEAD_DIM = DIM // N_HEADS
LOG2_HD = HEAD_DIM.bit_length() - 1          # HEAD_DIM is a power of two
N_LAYERS = 2
MAX_SEQ = 16
MULTIPLE_OF = 32
FFN_DIM = MULTIPLE_OF * ((int(2 * 4 * DIM / 3) + MULTIPLE_OF - 1) // MULTIPLE_OF)  # 192
NORM_EPS = 1e-5
NEG_INF = float(jnp.finfo(jnp.float32).min)  # matches torch.finfo(float32).min


# ---------------- fused Pallas kernel (grid over layers) ----------------

def _fused_encoder_kernel(ids_ref, maskc_ref, bias_ref, cos_ref, sin_ref, emb_ref,
                          norms_ref, wqkv_ref, wo_ref, w13_ref, w2_ref,
                          enc_ref, logits_ref, h_ref, *, batch, seqlen):
    """One grid step == one transformer layer.  Shapes (kernel view):

      ids   (BS,1) i32 | mask_col (BS,1) f32 | bias (BS,BS) f32 (pad + batch blockdiag)
      cos/sin (BS,D) f32 ([c|c] / [s|s] per head) | emb (V,D) bf16
      norms (2,D) f32 | wqkv (D,3D) bf16 | wo (D,D) bf16 | w13 (D,2F) bf16 | w2 (F,D) bf16
      outputs: enc (BS,D) f32, logits (BS,V) f32   scratch: h (BS,D) f32 (persists)
    """
    li = pl.program_id(0)
    bs = batch * seqlen
    half = HEAD_DIM // 2

    # ---- layer-0 prologue: token embedding gather (one-hot MXU matmul) + mask ----
    @pl.when(li == 0)
    def _():
        ids = ids_ref[...]                                               # (BS,1) i32
        viota = jax.lax.broadcasted_iota(jnp.int32, (bs, VOCAB), 1)
        onehot = jnp.where(viota == ids, 1.0, 0.0).astype(jnp.bfloat16)  # (BS,V)
        h0 = jnp.dot(onehot, emb_ref[...], preferred_element_type=jnp.float32)
        h_ref[...] = h0 * maskc_ref[...]
        # dropout: eval mode -> identity

    cos = cos_ref[...]                  # (BS, D)
    sin = sin_ref[...]                  # (BS, D)
    bias = bias_ref[...]                # (BS, BS)

    # rotate-half signed permutation P (D, D): x @ P = [-x_imag | x_real] per head.
    row = jax.lax.broadcasted_iota(jnp.int32, (DIM, DIM), 0)
    col = jax.lax.broadcasted_iota(jnp.int32, (DIM, DIM), 1)
    same_head = (row >> LOG2_HD) == (col >> LOG2_HD)
    rr = row & (HEAD_DIM - 1)
    cc = col & (HEAD_DIM - 1)
    p_mat = (jnp.where(same_head & (cc == rr + half), 1.0, 0.0)
             - jnp.where(same_head & (cc == rr - half), 1.0, 0.0))       # (D, D) f32

    lane = jax.lax.broadcasted_iota(jnp.int32, (1, DIM), 1)              # head lane ids

    def rms_norm(x, w):
        var = jnp.mean(x * x, axis=-1, keepdims=True)
        return x * jax.lax.rsqrt(var + NORM_EPS) * w

    def rope(x):
        # full-width rotate-half: wq/wk columns were permuted per head at init so the
        # scores match the interleaved torch reference exactly.
        return x * cos + jnp.dot(x, p_mat, preferred_element_type=jnp.float32) * sin

    h = h_ref[...]                                                       # (BS, D) f32

    # ---- self-attention sub-block ----
    xn = rms_norm(h, norms_ref[0:1, :])
    qkv = jnp.dot(xn.astype(jnp.bfloat16), wqkv_ref[...],
                  preferred_element_type=jnp.float32)                    # (BS, 3D) f32
    q = rope(qkv[:, :DIM])               # 1/sqrt(HEAD_DIM) folded into wq at init
    k = rope(qkv[:, DIM:2 * DIM])
    v = qkv[:, 2 * DIM:]

    attn = jnp.zeros((bs, DIM), jnp.float32)
    for hh in range(N_HEADS):
        # head selection via lane mask (VPU) instead of 16-lane slices (XLU copies)
        m_h = ((lane >> LOG2_HD) == hh).astype(jnp.float32)              # (1, D)
        s_h = jnp.einsum('qd,kd->qk', q * m_h, k,
                         preferred_element_type=jnp.float32) + bias      # (BS, BS)
        mx = jnp.max(s_h, axis=-1, keepdims=True)
        p = jnp.exp(s_h - mx)
        denom = jnp.sum(p, axis=-1, keepdims=True)
        p = p * pl.reciprocal(denom, approx=True)
        attn = attn + jnp.dot(p, v * m_h, preferred_element_type=jnp.float32)

    h = h + jnp.dot(attn.astype(jnp.bfloat16), wo_ref[...],
                    preferred_element_type=jnp.float32)

    # ---- SwiGLU FFN sub-block ----
    xn = rms_norm(h, norms_ref[1:2, :])
    h13 = jnp.dot(xn.astype(jnp.bfloat16), w13_ref[...],
                  preferred_element_type=jnp.float32)                    # (BS, 2F)
    h1 = h13[:, :FFN_DIM]
    h3 = h13[:, FFN_DIM:]
    g = h1 * jax.nn.sigmoid(h1) * h3                                     # f32 VPU/EUP
    h = h + jnp.dot(g.astype(jnp.bfloat16), w2_ref[...],
                    preferred_element_type=jnp.float32)

    h_ref[...] = h

    # ---- last-layer epilogue: encoder output + tied-embedding logits ----
    @pl.when(li == N_LAYERS - 1)
    def _():
        enc_ref[...] = h
        logits_ref[...] = jnp.einsum('sd,vd->sv', h.astype(jnp.bfloat16), emb_ref[...],
                                     preferred_element_type=jnp.float32)


# ---------------- params & glue ----------------

def precompute_freqs_cis(dim, end, theta=10000.0):
    freqs = 1.0 / (theta ** (jnp.arange(0, dim, 2, dtype=jnp.float32)[: dim // 2] / dim))
    t = jnp.arange(end, dtype=jnp.float32)
    freqs = jnp.outer(t, freqs)
    return jnp.cos(freqs), jnp.sin(freqs)


def init_params(key):
    def nrm(k, shape, scale=0.02):
        return scale * jax.random.normal(k, shape, dtype=jnp.float32)

    keys = jax.random.split(key, 1 + N_LAYERS)
    emb = nrm(keys[0], (VOCAB, DIM))

    # RoPE column permutation for wq/wk: per head, even (real) columns first, odd
    # (imag) columns last.  Applied identically to q and k so scores are unchanged,
    # while enabling rotate-half RoPE in the kernel.
    perm_head = list(range(0, HEAD_DIM, 2)) + list(range(1, HEAD_DIM, 2))
    perm = jnp.array([hh * HEAD_DIM + p for hh in range(N_HEADS) for p in perm_head],
                     dtype=jnp.int32)
    attn_scale = 1.0 / math.sqrt(HEAD_DIM)       # folded into wq (zero runtime cost)

    wqkv_l, wo_l, w13_l, w2_l, norms_l = [], [], [], [], []
    for li in range(N_LAYERS):
        lk = jax.random.split(keys[1 + li], 7)
        wq = (nrm(lk[0], (DIM, DIM)) * attn_scale)[:, perm]
        wk = nrm(lk[1], (DIM, DIM))[:, perm]
        wv = nrm(lk[2], (DIM, DIM))
        wqkv_l.append(jnp.concatenate([wq, wk, wv], axis=1))             # (D, 3D)
        wo_l.append(nrm(lk[3], (DIM, DIM)))
        w13_l.append(jnp.concatenate([nrm(lk[4], (DIM, FFN_DIM)),
                                      nrm(lk[5], (DIM, FFN_DIM))], axis=1))  # (D, 2F)
        w2_l.append(nrm(lk[6], (FFN_DIM, DIM)))
        norms_l.append(jnp.ones((2, DIM), jnp.float32))  # [attn_norm; ffn_norm]

    cos, sin = precompute_freqs_cis(HEAD_DIM, MAX_SEQ)
    return {
        "tok_emb": emb.astype(jnp.bfloat16),                             # tied weights
        "norms": jnp.stack(norms_l),                                     # (L, 2, D) f32
        "wqkv": jnp.stack(wqkv_l).astype(jnp.bfloat16),                  # (L, D, 3D)
        "wo": jnp.stack(wo_l).astype(jnp.bfloat16),                      # (L, D, D)
        "w13": jnp.stack(w13_l).astype(jnp.bfloat16),                    # (L, D, 2F)
        "w2": jnp.stack(w2_l).astype(jnp.bfloat16),                      # (L, F, D)
        "freqs_cos": cos,
        "freqs_sin": sin,
    }


def llama2_t5_encoder_forward(params, input_ids, attn_mask):
    """Returns (logits[B,1,V], encoder_output[B,S,D]) — the labels=None path."""
    B, S = input_ids.shape
    BS = B * S

    ids2d = input_ids.reshape(BS, 1).astype(jnp.int32)
    mask_f = attn_mask.astype(jnp.float32)                               # (B, S)
    mask_col = mask_f.reshape(BS, 1)

    # additive attention bias: padding mask (as in the torch reference) plus a
    # block-diagonal batch mask, so attention is a plain (BS, BS) score per head.
    pad_bias = (1.0 - mask_f) * NEG_INF                                  # (B, S)
    row_b = jnp.repeat(jnp.arange(B, dtype=jnp.int32), S)                # (BS,)
    same_batch = row_b[:, None] == row_b[None, :]                        # (BS, BS)
    bias_full = jnp.where(same_batch,
                          jnp.broadcast_to(pad_bias.reshape(1, BS), (BS, BS)),
                          NEG_INF)

    # cos/sin tiled to full (BS, D): [cos|cos] / [sin|sin] per head (sign lives in P)
    cos = params["freqs_cos"][:S]                                        # (S, Dh/2)
    sin = params["freqs_sin"][:S]
    cos_h = jnp.concatenate([cos, cos], axis=-1)                         # (S, Dh)
    sin_h = jnp.concatenate([sin, sin], axis=-1)
    cos_full = jnp.tile(jnp.tile(cos_h, (1, N_HEADS)), (B, 1))           # (BS, D)
    sin_full = jnp.tile(jnp.tile(sin_h, (1, N_HEADS)), (B, 1))

    def full_spec(shape):
        return pl.BlockSpec(shape, lambda li, _s=shape: (0,) * len(_s))

    def layer_spec(trailing_shape):
        return pl.BlockSpec((None,) + trailing_shape, lambda li: (li, 0, 0))

    in_specs = [
        full_spec((BS, 1)),            # ids
        full_spec((BS, 1)),            # mask_col
        full_spec((BS, BS)),           # bias
        full_spec((BS, DIM)),          # cos
        full_spec((BS, DIM)),          # sin
        full_spec((VOCAB, DIM)),       # emb (bf16, shared by gather + logits)
        layer_spec((2, DIM)),          # norms_all
        layer_spec((DIM, 3 * DIM)),    # wqkv_all
        layer_spec((DIM, DIM)),        # wo_all
        layer_spec((DIM, 2 * FFN_DIM)),  # w13_all
        layer_spec((FFN_DIM, DIM)),    # w2_all
    ]
    out_specs = (full_spec((BS, DIM)), full_spec((BS, VOCAB)))

    kernel = functools.partial(_fused_encoder_kernel, batch=B, seqlen=S)

    enc_flat, logits_all = pl.pallas_call(
        kernel,
        out_shape=(jax.ShapeDtypeStruct((BS, DIM), jnp.float32),
                   jax.ShapeDtypeStruct((BS, VOCAB), jnp.float32)),
        grid_spec=pltpu.PrefetchScalarGridSpec(
            num_scalar_prefetch=0,
            grid=(N_LAYERS,),
            in_specs=in_specs,
            out_specs=out_specs,
            scratch_shapes=[pltpu.VMEM((BS, DIM), jnp.float32)],  # h persists across layers
        ),
        compiler_params=pltpu.CompilerParams(dimension_semantics=("arbitrary",)),
    )(ids2d, mask_col, bias_full, cos_full, sin_full, params["tok_emb"],
      params["norms"], params["wqkv"], params["wo"], params["w13"], params["w2"])

    encoder_output = enc_flat.reshape(B, S, DIM)
    logits = logits_all.reshape(B, S, VOCAB)[:, -1:, :]                  # (B, 1, V)
    # TODO(synk): labels/cross-entropy (GLM/MLM) and training-mode dropout /
    #             layer_dropout branches are training-only and not implemented.
    return logits, encoder_output


if __name__ == "__main__":
    key = jax.random.PRNGKey(0)
    pkey, ikey = jax.random.split(key)
    params = init_params(pkey)

    B, S = 2, 8
    input_ids = jax.random.randint(ikey, (B, S), 0, VOCAB, dtype=jnp.int32)
    attn_mask = jnp.array([[1, 1, 1, 1, 1, 1, 1, 1],
                           [1, 1, 1, 1, 1, 1, 0, 0]], dtype=jnp.float32)

    fwd = jax.jit(llama2_t5_encoder_forward)
    logits, enc_out = fwd(params, input_ids, attn_mask)
    jax.block_until_ready((logits, enc_out))

    assert logits.shape == (B, 1, VOCAB)
    assert enc_out.shape == (B, S, DIM)
    assert bool(jnp.all(jnp.isfinite(logits))) and bool(jnp.all(jnp.isfinite(enc_out)))
    print("KERNEL_OK")
</pallas_src>

<mosaic_0001>
module attributes {stable_mosaic.version = 11 : i64} {
  func.func @_fused_encoder_kernel(%arg0: i32, %arg1: memref<16x1xi32, #tpu.memory_space<vmem>>, %arg2: memref<16x1xf32, #tpu.memory_space<vmem>>, %arg3: memref<16x16xf32, #tpu.memory_space<vmem>>, %arg4: memref<16x64xf32, #tpu.memory_space<vmem>>, %arg5: memref<16x64xf32, #tpu.memory_space<vmem>>, %arg6: memref<256x64xbf16, #tpu.memory_space<vmem>>, %arg7: memref<1x2x64xf32, #tpu.memory_space<vmem>>, %arg8: memref<1x64x192xbf16, #tpu.memory_space<vmem>>, %arg9: memref<1x64x64xbf16, #tpu.memory_space<vmem>>, %arg10: memref<1x64x384xbf16, #tpu.memory_space<vmem>>, %arg11: memref<1x192x64xbf16, #tpu.memory_space<vmem>>, %arg12: memref<16x64xf32, #tpu.memory_space<vmem>>, %arg13: memref<16x256xf32, #tpu.memory_space<vmem>>, %arg14: memref<16x64xf32, #tpu.memory_space<vmem>>) attributes {dimension_semantics = [#tpu.dimension_semantics<arbitrary>], iteration_bounds = array<i64: 2>, scalar_prefetch = 0 : i64, scratch_operands = 1 : i64, tpu.core_type = #tpu.core_type<tc>, window_params = [{pipeline_mode = #tpu.pipeline_mode<synchronous>, transform_indices = @transform_0, window_bounds = array<i64: 16, 1>}, {pipeline_mode = #tpu.pipeline_mode<synchronous>, transform_indices = @transform_1, window_bounds = array<i64: 16, 1>}, {pipeline_mode = #tpu.pipeline_mode<synchronous>, transform_indices = @transform_2, window_bounds = array<i64: 16, 16>}, {pipeline_mode = #tpu.pipeline_mode<synchronous>, transform_indices = @transform_3, window_bounds = array<i64: 16, 64>}, {pipeline_mode = #tpu.pipeline_mode<synchronous>, transform_indices = @transform_4, window_bounds = array<i64: 16, 64>}, {pipeline_mode = #tpu.pipeline_mode<synchronous>, transform_indices = @transform_5, window_bounds = array<i64: 256, 64>}, {transform_indices = @transform_6, window_bounds = array<i64: 1, 2, 64>}, {transform_indices = @transform_7, window_bounds = array<i64: 1, 64, 192>}, {transform_indices = @transform_8, window_bounds = array<i64: 1, 64, 64>}, {transform_indices = @transform_9, window_bounds = array<i64: 1, 64, 384>}, {transform_indices = @transform_10, window_bounds = array<i64: 1, 192, 64>}, {pipeline_mode = #tpu.pipeline_mode<synchronous>, transform_indices = @transform_11, window_bounds = array<i64: 16, 64>}, {pipeline_mode = #tpu.pipeline_mode<synchronous>, transform_indices = @transform_12, window_bounds = array<i64: 16, 256>}]} {
    %c0_i32 = arith.constant 0 : i32
    %0 = arith.cmpi eq, %arg0, %c0_i32 : i32
    %1 = arith.extui %0 : i1 to i32
    %c0_i32_0 = arith.constant 0 : i32
    %2 = arith.cmpi ne, %1, %c0_i32_0 : i32
    scf.if %2 {
      %c0_70 = arith.constant 0 : index
      %c0_71 = arith.constant 0 : index
      %201 = vector.load %arg1[%c0_70, %c0_71] : memref<16x1xi32, #tpu.memory_space<vmem>>, vector<16x1xi32>
      %202 = tpu.iota {dimensions = array<i32: 1>} : vector<16x256xi32>
      %203 = vector.broadcast %201 : vector<16x1xi32> to vector<16x256xi32>
      %204 = arith.cmpi eq, %202, %203 : vector<16x256xi32>
      %cst_72 = arith.constant 1.000000e+00 : f32
      %cst_73 = arith.constant 0.000000e+00 : f32
      %205 = vector.broadcast %cst_72 : f32 to vector<16x256xf32>
      %206 = vector.broadcast %cst_73 : f32 to vector<16x256xf32>
      %207 = arith.select %204, %205, %206 : vector<16x256xi1>, vector<16x256xf32>
      %208 = arith.truncf %207 : vector<16x256xf32> to vector<16x256xbf16>
      %c0_74 = arith.constant 0 : index
      %c0_75 = arith.constant 0 : index
      %209 = vector.load %arg6[%c0_74, %c0_75] : memref<256x64xbf16, #tpu.memory_space<vmem>>, vector<256x64xbf16>
      %cst_76 = arith.constant dense<0.000000e+00> : vector<16x64xf32>
      %210 = tpu.matmul %208, %209, %cst_76 {dimension_numbers = #tpu.dot_dimension_numbers<[1], [0], [0], [1], [0, 0, 1, 1], [], []>} : vector<16x256xbf16>, vector<256x64xbf16>, vector<16x64xf32> -> vector<16x64xf32>
      %c0_77 = arith.constant 0 : index
      %c0_78 = arith.constant 0 : index
      %211 = vector.load %arg2[%c0_77, %c0_78] : memref<16x1xf32, #tpu.memory_space<vmem>>, vector<16x1xf32>
      %212 = vector.broadcast %211 : vector<16x1xf32> to vector<16x64xf32>
      %213 = arith.mulf %210, %212 : vector<16x64xf32>
      %c0_79 = arith.constant 0 : index
      %c0_80 = arith.constant 0 : index
      %214 = vector.load %arg14[%c0_79, %c0_80] : memref<16x64xf32, #tpu.memory_space<vmem>>, vector<16x64xf32>
      tpu.vector_store %arg14[%c0_79, %c0_80], %213 {strides = array<i32>} : memref<16x64xf32, #tpu.memory_space<vmem>>, vector<16x64xf32>,
    } else {
    }
    %c0 = arith.constant 0 : index
    %c0_1 = arith.constant 0 : index
    %3 = vector.load %arg4[%c0, %c0_1] : memref<16x64xf32, #tpu.memory_space<vmem>>, vector<16x64xf32>
    %c0_2 = arith.constant 0 : index
    %c0_3 = arith.constant 0 : index
    %4 = vector.load %arg5[%c0_2, %c0_3] : memref<16x64xf32, #tpu.memory_space<vmem>>, vector<16x64xf32>
    %c0_4 = arith.constant 0 : index
    %c0_5 = arith.constant 0 : index
    %5 = vector.load %arg3[%c0_4, %c0_5] : memref<16x16xf32, #tpu.memory_space<vmem>>, vector<16x16xf32>
    %6 = tpu.iota {dimensions = array<i32: 0>} : vector<64x64xi32>
    %7 = tpu.iota {dimensions = array<i32: 1>} : vector<64x64xi32>
    %c4_i32 = arith.constant 4 : i32
    %8 = vector.broadcast %c4_i32 : i32 to vector<64x64xi32>
    %9 = arith.shrsi %6, %8 : vector<64x64xi32>
    %c4_i32_6 = arith.constant 4 : i32
    %10 = vector.broadcast %c4_i32_6 : i32 to vector<64x64xi32>
    %11 = arith.shrsi %7, %10 : vector<64x64xi32>
    %12 = arith.cmpi eq, %9, %11 : vector<64x64xi32>
    %c15_i32 = arith.constant 15 : i32
    %13 = vector.broadcast %c15_i32 : i32 to vector<64x64xi32>
    %14 = arith.andi %6, %13 : vector<64x64xi32>
    %c15_i32_7 = arith.constant 15 : i32
    %15 = vector.broadcast %c15_i32_7 : i32 to vector<64x64xi32>
    %16 = arith.andi %7, %15 : vector<64x64xi32>
    %c8_i32 = arith.constant 8 : i32
    %17 = vector.broadcast %c8_i32 : i32 to vector<64x64xi32>
    %18 = arith.addi %14, %17 : vector<64x64xi32>
    %19 = arith.cmpi eq, %16, %18 : vector<64x64xi32>
    %20 = arith.andi %12, %19 : vector<64x64xi1>
    %cst = arith.constant 1.000000e+00 : f32
    %cst_8 = arith.constant 0.000000e+00 : f32
    %21 = vector.broadcast %cst : f32 to vector<64x64xf32>
    %22 = vector.broadcast %cst_8 : f32 to vector<64x64xf32>
    %23 = arith.select %20, %21, %22 : vector<64x64xi1>, vector<64x64xf32>
    %c8_i32_9 = arith.constant 8 : i32
    %24 = vector.broadcast %c8_i32_9 : i32 to vector<64x64xi32>
    %25 = arith.subi %14, %24 : vector<64x64xi32>
    %26 = arith.cmpi eq, %16, %25 : vector<64x64xi32>
    %27 = arith.andi %12, %26 : vector<64x64xi1>
    %cst_10 = arith.constant 1.000000e+00 : f32
    %cst_11 = arith.constant 0.000000e+00 : f32
    %28 = vector.broadcast %cst_10 : f32 to vector<64x64xf32>
    %29 = vector.broadcast %cst_11 : f32 to vector<64x64xf32>
    %30 = arith.select %27, %28, %29 : vector<64x64xi1>, vector<64x64xf32>
    %31 = arith.subf %23, %30 : vector<64x64xf32>
    %32 = tpu.iota {dimensions = array<i32: 1>} : vector<1x64xi32>
    %c0_12 = arith.constant 0 : index
    %c0_13 = arith.constant 0 : index
    %33 = vector.load %arg14[%c0_12, %c0_13] : memref<16x64xf32, #tpu.memory_space<vmem>>, vector<16x64xf32>
    %c0_14 = arith.constant 0 : index
    %c0_15 = arith.constant 0 : index
    %c0_16 = arith.constant 0 : index
    %34 = vector.load %arg7[%c0_14, %c0_15, %c0_16] : memref<1x2x64xf32, #tpu.memory_space<vmem>>, vector<1x1x64xf32>
    %35 = vector.shape_cast %34 : vector<1x1x64xf32> to vector<1x64xf32>
    %36 = arith.mulf %33, %33 : vector<16x64xf32>
    %cst_17 = arith.constant dense<0.000000e+00> : vector<16xf32>
    %37 = vector.multi_reduction <add>, %36, %cst_17 [1] : vector<16x64xf32> to vector<16xf32>
    %38 = vector.shape_cast %37 : vector<16xf32> to vector<16x1xf32>
    %cst_18 = arith.constant 6.400000e+01 : f32
    %39 = vector.broadcast %cst_18 : f32 to vector<16x1xf32>
    %40 = arith.divf %38, %39 : vector<16x1xf32>
    %cst_19 = arith.constant 9.99999974E-6 : f32
    %41 = vector.broadcast %cst_19 : f32 to vector<16x1xf32>
    %42 = arith.addf %40, %41 : vector<16x1xf32>
    %43 = math.rsqrt %42 : vector<16x1xf32>
    %44 = vector.broadcast %43 : vector<16x1xf32> to vector<16x64xf32>
    %45 = arith.mulf %33, %44 : vector<16x64xf32>
    %46 = vector.broadcast %35 : vector<1x64xf32> to vector<16x64xf32>
    %47 = arith.mulf %45, %46 : vector<16x64xf32>
    %48 = arith.truncf %47 : vector<16x64xf32> to vector<16x64xbf16>
    %c0_20 = arith.constant 0 : index
    %c0_21 = arith.constant 0 : index
    %c0_22 = arith.constant 0 : index
    %49 = vector.load %arg8[%c0_20, %c0_21, %c0_22] : memref<1x64x192xbf16, #tpu.memory_space<vmem>>, vector<1x64x192xbf16>
    %50 = vector.shape_cast %49 : vector<1x64x192xbf16> to vector<64x192xbf16>
    %cst_23 = arith.constant dense<0.000000e+00> : vector<16x192xf32>
    %51 = tpu.matmul %48, %50, %cst_23 {dimension_numbers = #tpu.dot_dimension_numbers<[1], [0], [0], [1], [0, 0, 1, 1], [], []>} : vector<16x64xbf16>, vector<64x192xbf16>, vector<16x192xf32> -> vector<16x192xf32>
    %52 = vector.extract_strided_slice %51 {offsets = [0, 0], sizes = [16, 64], strides = [1, 1]} : vector<16x192xf32> to vector<16x64xf32>
    %53 = arith.mulf %52, %3 : vector<16x64xf32>
    %cst_24 = arith.constant dense<0.000000e+00> : vector<16x64xf32>
    %54 = tpu.matmul %52, %31, %cst_24 {dimension_numbers = #tpu.dot_dimension_numbers<[1], [0], [0], [1], [0, 0, 1, 1], [], []>} : vector<16x64xf32>, vector<64x64xf32>, vector<16x64xf32> -> vector<16x64xf32>
    %55 = arith.mulf %54, %4 : vector<16x64xf32>
    %56 = arith.addf %53, %55 : vector<16x64xf32>
    %57 = vector.extract_strided_slice %51 {offsets = [0, 64], sizes = [16, 64], strides = [1, 1]} : vector<16x192xf32> to vector<16x64xf32>
    %58 = arith.mulf %57, %3 : vector<16x64xf32>
    %cst_25 = arith.constant dense<0.000000e+00> : vector<16x64xf32>
    %59 = tpu.matmul %57, %31, %cst_25 {dimension_numbers = #tpu.dot_dimension_numbers<[1], [0], [0], [1], [0, 0, 1, 1], [], []>} : vector<16x64xf32>, vector<64x64xf32>, vector<16x64xf32> -> vector<16x64xf32>
    %60 = arith.mulf %59, %4 : vector<16x64xf32>
    %61 = arith.addf %58, %60 : vector<16x64xf32>
    %62 = vector.extract_strided_slice %51 {offsets = [0, 128], sizes = [16, 64], strides = [1, 1]} : vector<16x192xf32> to vector<16x64xf32>
    %cst_26 = arith.constant 0.000000e+00 : f32
    %63 = vector.broadcast %cst_26 : f32 to vector<16x64xf32>
    %c4_i32_27 = arith.constant 4 : i32
    %64 = vector.broadcast %c4_i32_27 : i32 to vector<1x64xi32>
    %65 = arith.shrsi %32, %64 : vector<1x64xi32>
    %c0_i32_28 = arith.constant 0 : i32
    %66 = vector.broadcast %c0_i32_28 : i32 to vector<1x64xi32>
    %67 = arith.cmpi eq, %65, %66 : vector<1x64xi32>
    %68 = arith.extui %67 : vector<1x64xi1> to vector<1x64xi32>
    %69 = arith.sitofp %68 : vector<1x64xi32> to vector<1x64xf32>
    %70 = vector.broadcast %69 : vector<1x64xf32> to vector<16x64xf32>
    %71 = arith.mulf %56, %70 : vector<16x64xf32>
    "tpu.trace_start"() <{level = 10 : i32, message = "qd,kd->qk"}> : () -> ()
    %cst_29 = arith.constant dense<0.000000e+00> : vector<16x16xf32>
    %72 = tpu.matmul %71, %61, %cst_29 {dimension_numbers = #tpu.dot_dimension_numbers<[1], [1], [0], [0], [0, 0, 1, 0], [], []>} : vector<16x64xf32>, vector<16x64xf32>, vector<16x16xf32> -> vector<16x16xf32>
    "tpu.trace_stop"() : () -> ()
    %73 = arith.addf %72, %5 : vector<16x16xf32>
    %cst_30 = arith.constant dense<0xFF800000> : vector<16xf32>
    %74 = vector.multi_reduction <maximumf>, %73, %cst_30 [1] : vector<16x16xf32> to vector<16xf32>
    %75 = vector.shape_cast %74 : vector<16xf32> to vector<16x1xf32>
    %76 = vector.broadcast %75 : vector<16x1xf32> to vector<16x16xf32>
    %77 = arith.subf %73, %76 : vector<16x16xf32>
    %78 = math.exp %77 : vector<16x16xf32>
    %cst_31 = arith.constant dense<0.000000e+00> : vector<16xf32>
    %79 = vector.multi_reduction <add>, %78, %cst_31 [1] : vector<16x16xf32> to vector<16xf32>
    %80 = vector.shape_cast %79 : vector<16xf32> to vector<16x1xf32>
    %81 = tpu.reciprocal %80 {approx = true} : vector<16x1xf32> -> vector<16x1xf32>
    %82 = vector.broadcast %81 : vector<16x1xf32> to vector<16x16xf32>
    %83 = arith.mulf %78, %82 : vector<16x16xf32>
    %84 = vector.broadcast %69 : vector<1x64xf32> to vector<16x64xf32>
    %85 = arith.mulf %62, %84 : vector<16x64xf32>
    %cst_32 = arith.constant dense<0.000000e+00> : vector<16x64xf32>
    %86 = tpu.matmul %83, %85, %cst_32 {dimension_numbers = #tpu.dot_dimension_numbers<[1], [0], [0], [1], [0, 0, 1, 1], [], []>} : vector<16x16xf32>, vector<16x64xf32>, vector<16x64xf32> -> vector<16x64xf32>
    %87 = arith.addf %63, %86 : vector<16x64xf32>
    %c4_i32_33 = arith.constant 4 : i32
    %88 = vector.broadcast %c4_i32_33 : i32 to vector<1x64xi32>
    %89 = arith.shrsi %32, %88 : vector<1x64xi32>
    %c1_i32 = arith.constant 1 : i32
    %90 = vector.broadcast %c1_i32 : i32 to vector<1x64xi32>
    %91 = arith.cmpi eq, %89, %90 : vector<1x64xi32>
    %92 = arith.extui %91 : vector<1x64xi1> to vector<1x64xi32>
    %93 = arith.sitofp %92 : vector<1x64xi32> to vector<1x64xf32>
    %94 = vector.broadcast %93 : vector<1x64xf32> to vector<16x64xf32>
    %95 = arith.mulf %56, %94 : vector<16x64xf32>
    "tpu.trace_start"() <{level = 10 : i32, message = "qd,kd->qk"}> : () -> ()
    %cst_34 = arith.constant dense<0.000000e+00> : vector<16x16xf32>
    %96 = tpu.matmul %95, %61, %cst_34 {dimension_numbers = #tpu.dot_dimension_numbers<[1], [1], [0], [0], [0, 0, 1, 0], [], []>} : vector<16x64xf32>, vector<16x64xf32>, vector<16x16xf32> -> vector<16x16xf32>
    "tpu.trace_stop"() : () -> ()
    %97 = arith.addf %96, %5 : vector<16x16xf32>
    %cst_35 = arith.constant dense<0xFF800000> : vector<16xf32>
    %98 = vector.multi_reduction <maximumf>, %97, %cst_35 [1] : vector<16x16xf32> to vector<16xf32>
    %99 = vector.shape_cast %98 : vector<16xf32> to vector<16x1xf32>
    %100 = vector.broadcast %99 : vector<16x1xf32> to vector<16x16xf32>
    %101 = arith.subf %97, %100 : vector<16x16xf32>
    %102 = math.exp %101 : vector<16x16xf32>
    %cst_36 = arith.constant dense<0.000000e+00> : vector<16xf32>
    %103 = vector.multi_reduction <add>, %102, %cst_36 [1] : vector<16x16xf32> to vector<16xf32>
    %104 = vector.shape_cast %103 : vector<16xf32> to vector<16x1xf32>
    %105 = tpu.reciprocal %104 {approx = true} : vector<16x1xf32> -> vector<16x1xf32>
    %106 = vector.broadcast %105 : vector<16x1xf32> to vector<16x16xf32>
    %107 = arith.mulf %102, %106 : vector<16x16xf32>
    %108 = vector.broadcast %93 : vector<1x64xf32> to vector<16x64xf32>
    %109 = arith.mulf %62, %108 : vector<16x64xf32>
    %cst_37 = arith.constant dense<0.000000e+00> : vector<16x64xf32>
    %110 = tpu.matmul %107, %109, %cst_37 {dimension_numbers = #tpu.dot_dimension_numbers<[1], [0], [0], [1], [0, 0, 1, 1], [], []>} : vector<16x16xf32>, vector<16x64xf32>, vector<16x64xf32> -> vector<16x64xf32>
    %111 = arith.addf %87, %110 : vector<16x64xf32>
    %c4_i32_38 = arith.constant 4 : i32
    %112 = vector.broadcast %c4_i32_38 : i32 to vector<1x64xi32>
    %113 = arith.shrsi %32, %112 : vector<1x64xi32>
    %c2_i32 = arith.constant 2 : i32
    %114 = vector.broadcast %c2_i32 : i32 to vector<1x64xi32>
    %115 = arith.cmpi eq, %113, %114 : vector<1x64xi32>
    %116 = arith.extui %115 : vector<1x64xi1> to vector<1x64xi32>
    %117 = arith.sitofp %116 : vector<1x64xi32> to vector<1x64xf32>
    %118 = vector.broadcast %117 : vector<1x64xf32> to vector<16x64xf32>
    %119 = arith.mulf %56, %118 : vector<16x64xf32>
    "tpu.trace_start"() <{level = 10 : i32, message = "qd,kd->qk"}> : () -> ()
    %cst_39 = arith.constant dense<0.000000e+00> : vector<16x16xf32>
    %120 = tpu.matmul %119, %61, %cst_39 {dimension_numbers = #tpu.dot_dimension_numbers<[1], [1], [0], [0], [0, 0, 1, 0], [], []>} : vector<16x64xf32>, vector<16x64xf32>, vector<16x16xf32> -> vector<16x16xf32>
    "tpu.trace_stop"() : () -> ()
    %121 = arith.addf %120, %5 : vector<16x16xf32>
    %cst_40 = arith.constant dense<0xFF800000> : vector<16xf32>
    %122 = vector.multi_reduction <maximumf>, %121, %cst_40 [1] : vector<16x16xf32> to vector<16xf32>
    %123 = vector.shape_cast %122 : vector<16xf32> to vector<16x1xf32>
    %124 = vector.broadcast %123 : vector<16x1xf32> to vector<16x16xf32>
    %125 = arith.subf %121, %124 : vector<16x16xf32>
    %126 = math.exp %125 : vector<16x16xf32>
    %cst_41 = arith.constant dense<0.000000e+00> : vector<16xf32>
    %127 = vector.multi_reduction <add>, %126, %cst_41 [1] : vector<16x16xf32> to vector<16xf32>
    %128 = vector.shape_cast %127 : vector<16xf32> to vector<16x1xf32>
    %129 = tpu.reciprocal %128 {approx = true} : vector<16x1xf32> -> vector<16x1xf32>
    %130 = vector.broadcast %129 : vector<16x1xf32> to vector<16x16xf32>
    %131 = arith.mulf %126, %130 : vector<16x16xf32>
    %132 = vector.broadcast %117 : vector<1x64xf32> to vector<16x64xf32>
    %133 = arith.mulf %62, %132 : vector<16x64xf32>
    %cst_42 = arith.constant dense<0.000000e+00> : vector<16x64xf32>
    %134 = tpu.matmul %131, %133, %cst_42 {dimension_numbers = #tpu.dot_dimension_numbers<[1], [0], [0], [1], [0, 0, 1, 1], [], []>} : vector<16x16xf32>, vector<16x64xf32>, vector<16x64xf32> -> vector<16x64xf32>
    %135 = arith.addf %111, %134 : vector<16x64xf32>
    %c4_i32_43 = arith.constant 4 : i32
    %136 = vector.broadcast %c4_i32_43 : i32 to vector<1x64xi32>
    %137 = arith.shrsi %32, %136 : vector<1x64xi32>
    %c3_i32 = arith.constant 3 : i32
    %138 = vector.broadcast %c3_i32 : i32 to vector<1x64xi32>
    %139 = arith.cmpi eq, %137, %138 : vector<1x64xi32>
    %140 = arith.extui %139 : vector<1x64xi1> to vector<1x64xi32>
    %141 = arith.sitofp %140 : vector<1x64xi32> to vector<1x64xf32>
    %142 = vector.broadcast %141 : vector<1x64xf32> to vector<16x64xf32>
    %143 = arith.mulf %56, %142 : vector<16x64xf32>
    "tpu.trace_start"() <{level = 10 : i32, message = "qd,kd->qk"}> : () -> ()
    %cst_44 = arith.constant dense<0.000000e+00> : vector<16x16xf32>
    %144 = tpu.matmul %143, %61, %cst_44 {dimension_numbers = #tpu.dot_dimension_numbers<[1], [1], [0], [0], [0, 0, 1, 0], [], []>} : vector<16x64xf32>, vector<16x64xf32>, vector<16x16xf32> -> vector<16x16xf32>
    "tpu.trace_stop"() : () -> ()
    %145 = arith.addf %144, %5 : vector<16x16xf32>
    %cst_45 = arith.constant dense<0xFF800000> : vector<16xf32>
    %146 = vector.multi_reduction <maximumf>, %145, %cst_45 [1] : vector<16x16xf32> to vector<16xf32>
    %147 = vector.shape_cast %146 : vector<16xf32> to vector<16x1xf32>
    %148 = vector.broadcast %147 : vector<16x1xf32> to vector<16x16xf32>
    %149 = arith.subf %145, %148 : vector<16x16xf32>
    %150 = math.exp %149 : vector<16x16xf32>
    %cst_46 = arith.constant dense<0.000000e+00> : vector<16xf32>
    %151 = vector.multi_reduction <add>, %150, %cst_46 [1] : vector<16x16xf32> to vector<16xf32>
    %152 = vector.shape_cast %151 : vector<16xf32> to vector<16x1xf32>
    %153 = tpu.reciprocal %152 {approx = true} : vector<16x1xf32> -> vector<16x1xf32>
    %154 = vector.broadcast %153 : vector<16x1xf32> to vector<16x16xf32>
    %155 = arith.mulf %150, %154 : vector<16x16xf32>
    %156 = vector.broadcast %141 : vector<1x64xf32> to vector<16x64xf32>
    %157 = arith.mulf %62, %156 : vector<16x64xf32>
    %cst_47 = arith.constant dense<0.000000e+00> : vector<16x64xf32>
    %158 = tpu.matmul %155, %157, %cst_47 {dimension_numbers = #tpu.dot_dimension_numbers<[1], [0], [0], [1], [0, 0, 1, 1], [], []>} : vector<16x16xf32>, vector<16x64xf32>, vector<16x64xf32> -> vector<16x64xf32>
    %159 = arith.addf %135, %158 : vector<16x64xf32>
    %160 = arith.truncf %159 : vector<16x64xf32> to vector<16x64xbf16>
    %c0_48 = arith.constant 0 : index
    %c0_49 = arith.constant 0 : index
    %c0_50 = arith.constant 0 : index
    %161 = vector.load %arg9[%c0_48, %c0_49, %c0_50] : memref<1x64x64xbf16, #tpu.memory_space<vmem>>, vector<1x64x64xbf16>
    %162 = vector.shape_cast %161 : vector<1x64x64xbf16> to vector<64x64xbf16>
    %cst_51 = arith.constant dense<0.000000e+00> : vector<16x64xf32>
    %163 = tpu.matmul %160, %162, %cst_51 {dimension_numbers = #tpu.dot_dimension_numbers<[1], [0], [0], [1], [0, 0, 1, 1], [], []>} : vector<16x64xbf16>, vector<64x64xbf16>, vector<16x64xf32> -> vector<16x64xf32>
    %164 = arith.addf %33, %163 : vector<16x64xf32>
    %c0_52 = arith.constant 0 : index
    %c1 = arith.constant 1 : index
    %c0_53 = arith.constant 0 : index
    %165 = vector.load %arg7[%c0_52, %c1, %c0_53] : memref<1x2x64xf32, #tpu.memory_space<vmem>>, vector<1x1x64xf32>
    %166 = vector.shape_cast %165 : vector<1x1x64xf32> to vector<1x64xf32>
    %167 = arith.mulf %164, %164 : vector<16x64xf32>
    %cst_54 = arith.constant dense<0.000000e+00> : vector<16xf32>
    %168 = vector.multi_reduction <add>, %167, %cst_54 [1] : vector<16x64xf32> to vector<16xf32>
    %169 = vector.shape_cast %168 : vector<16xf32> to vector<16x1xf32>
    %cst_55 = arith.constant 6.400000e+01 : f32
    %170 = vector.broadcast %cst_55 : f32 to vector<16x1xf32>
    %171 = arith.divf %169, %170 : vector<16x1xf32>
    %cst_56 = arith.constant 9.99999974E-6 : f32
    %172 = vector.broadcast %cst_56 : f32 to vector<16x1xf32>
    %173 = arith.addf %171, %172 : vector<16x1xf32>
    %174 = math.rsqrt %173 : vector<16x1xf32>
    %175 = vector.broadcast %174 : vector<16x1xf32> to vector<16x64xf32>
    %176 = arith.mulf %164, %175 : vector<16x64xf32>
    %177 = vector.broadcast %166 : vector<1x64xf32> to vector<16x64xf32>
    %178 = arith.mulf %176, %177 : vector<16x64xf32>
    %179 = arith.truncf %178 : vector<16x64xf32> to vector<16x64xbf16>
    %c0_57 = arith.constant 0 : index
    %c0_58 = arith.constant 0 : index
    %c0_59 = arith.constant 0 : index
    %180 = vector.load %arg10[%c0_57, %c0_58, %c0_59] : memref<1x64x384xbf16, #tpu.memory_space<vmem>>, vector<1x64x384xbf16>
    %181 = vector.shape_cast %180 : vector<1x64x384xbf16> to vector<64x384xbf16>
    %cst_60 = arith.constant dense<0.000000e+00> : vector<16x384xf32>
    %182 = tpu.matmul %179, %181, %cst_60 {dimension_numbers = #tpu.dot_dimension_numbers<[1], [0], [0], [1], [0, 0, 1, 1], [], []>} : vector<16x64xbf16>, vector<64x384xbf16>, vector<16x384xf32> -> vector<16x384xf32>
    %183 = vector.extract_strided_slice %182 {offsets = [0, 0], sizes = [16, 192], strides = [1, 1]} : vector<16x384xf32> to vector<16x192xf32>
    %184 = vector.extract_strided_slice %182 {offsets = [0, 192], sizes = [16, 192], strides = [1, 1]} : vector<16x384xf32> to vector<16x192xf32>
    %185 = arith.negf %183 : vector<16x192xf32>
    %186 = math.exp %185 : vector<16x192xf32>
    %cst_61 = arith.constant 1.000000e+00 : f32
    %187 = vector.broadcast %cst_61 : f32 to vector<16x192xf32>
    %188 = arith.addf %187, %186 : vector<16x192xf32>
    %189 = arith.divf %187, %188 : vector<16x192xf32>
    %190 = arith.mulf %183, %189 : vector<16x192xf32>
    %191 = arith.mulf %190, %184 : vector<16x192xf32>
    %192 = arith.truncf %191 : vector<16x192xf32> to vector<16x192xbf16>
    %c0_62 = arith.constant 0 : index
    %c0_63 = arith.constant 0 : index
    %c0_64 = arith.constant 0 : index
    %193 = vector.load %arg11[%c0_62, %c0_63, %c0_64] : memref<1x192x64xbf16, #tpu.memory_space<vmem>>, vector<1x192x64xbf16>
    %194 = vector.shape_cast %193 : vector<1x192x64xbf16> to vector<192x64xbf16>
    %cst_65 = arith.constant dense<0.000000e+00> : vector<16x64xf32>
    %195 = tpu.matmul %192, %194, %cst_65 {dimension_numbers = #tpu.dot_dimension_numbers<[1], [0], [0], [1], [0, 0, 1, 1], [], []>} : vector<16x192xbf16>, vector<192x64xbf16>, vector<16x64xf32> -> vector<16x64xf32>
    %196 = arith.addf %164, %195 : vector<16x64xf32>
    %c0_66 = arith.constant 0 : index
    %c0_67 = arith.constant 0 : index
    %197 = vector.load %arg14[%c0_66, %c0_67] : memref<16x64xf32, #tpu.memory_space<vmem>>, vector<16x64xf32>
    tpu.vector_store %arg14[%c0_66, %c0_67], %196 {strides = array<i32>} : memref<16x64xf32, #tpu.memory_space<vmem>>, vector<16x64xf32>,
    %c1_i32_68 = arith.constant 1 : i32
    %198 = arith.cmpi eq, %arg0, %c1_i32_68 : i32
    %199 = arith.extui %198 : i1 to i32
    %c0_i32_69 = arith.constant 0 : i32
    %200 = arith.cmpi ne, %199, %c0_i32_69 : i32
    scf.if %200 {
      %c0_70 = arith.constant 0 : index
      %c0_71 = arith.constant 0 : index
      %201 = vector.load %arg12[%c0_70, %c0_71] : memref<16x64xf32, #tpu.memory_space<vmem>>, vector<16x64xf32>
      tpu.vector_store %arg12[%c0_70, %c0_71], %196 {strides = array<i32>} : memref<16x64xf32, #tpu.memory_space<vmem>>, vector<16x64xf32>,
      %202 = arith.truncf %196 : vector<16x64xf32> to vector<16x64xbf16>
      %c0_72 = arith.constant 0 : index
      %c0_73 = arith.constant 0 : index
      %203 = vector.load %arg6[%c0_72, %c0_73] : memref<256x64xbf16, #tpu.memory_space<vmem>>, vector<256x64xbf16>
      "tpu.trace_start"() <{level = 10 : i32, message = "sd,vd->sv"}> : () -> ()
      %cst_74 = arith.constant dense<0.000000e+00> : vector<16x256xf32>
      %204 = tpu.matmul %202, %203, %cst_74 {dimension_numbers = #tpu.dot_dimension_numbers<[1], [1], [0], [0], [0, 0, 1, 0], [], []>} : vector<16x64xbf16>, vector<256x64xbf16>, vector<16x256xf32> -> vector<16x256xf32>
      "tpu.trace_stop"() : () -> ()
      %c0_75 = arith.constant 0 : index
      %c0_76 = arith.constant 0 : index
      %205 = vector.load %arg13[%c0_75, %c0_76] : memref<16x256xf32, #tpu.memory_space<vmem>>, vector<16x256xf32>
      tpu.vector_store %arg13[%c0_75, %c0_76], %204 {strides = array<i32>} : memref<16x256xf32, #tpu.memory_space<vmem>>, vector<16x256xf32>,
    } else {
    }
    return
  }
  func.func @transform_0(%arg0: i32) -> (i32, i32) {
    %c0_i32 = arith.constant 0 : i32
    %c0_i32_0 = arith.constant 0 : i32
    %c0_i32_1 = arith.constant 0 : i32
    return %c0_i32, %c0_i32_0 : i32, i32
  }
  func.func @transform_1(%arg0: i32) -> (i32, i32) {
    %c0_i32 = arith.constant 0 : i32
    %c0_i32_0 = arith.constant 0 : i32
    %c0_i32_1 = arith.constant 0 : i32
    return %c0_i32, %c0_i32_0 : i32, i32
  }
  func.func @transform_2(%arg0: i32) -> (i32, i32) {
    %c0_i32 = arith.constant 0 : i32
    %c0_i32_0 = arith.constant 0 : i32
    %c0_i32_1 = arith.constant 0 : i32
    return %c0_i32, %c0_i32_0 : i32, i32
  }
  func.func @transform_3(%arg0: i32) -> (i32, i32) {
    %c0_i32 = arith.constant 0 : i32
    %c0_i32_0 = arith.constant 0 : i32
    %c0_i32_1 = arith.constant 0 : i32
    return %c0_i32, %c0_i32_0 : i32, i32
  }
  func.func @transform_4(%arg0: i32) -> (i32, i32) {
    %c0_i32 = arith.constant 0 : i32
    %c0_i32_0 = arith.constant 0 : i32
    %c0_i32_1 = arith.constant 0 : i32
    return %c0_i32, %c0_i32_0 : i32, i32
  }
  func.func @transform_5(%arg0: i32) -> (i32, i32) {
    %c0_i32 = arith.constant 0 : i32
    %c0_i32_0 = arith.constant 0 : i32
    %c0_i32_1 = arith.constant 0 : i32
    return %c0_i32, %c0_i32_0 : i32, i32
  }
  func.func @transform_6(%arg0: i32) -> (i32, i32, i32) {
    %c0_i32 = arith.constant 0 : i32
    %c0_i32_0 = arith.constant 0 : i32
    %c0_i32_1 = arith.constant 0 : i32
    return %arg0, %c0_i32, %c0_i32_0 : i32, i32, i32
  }
  func.func @transform_7(%arg0: i32) -> (i32, i32, i32) {
    %c0_i32 = arith.constant 0 : i32
    %c0_i32_0 = arith.constant 0 : i32
    %c0_i32_1 = arith.constant 0 : i32
    return %arg0, %c0_i32, %c0_i32_0 : i32, i32, i32
  }
  func.func @transform_8(%arg0: i32) -> (i32, i32, i32) {
    %c0_i32 = arith.constant 0 : i32
    %c0_i32_0 = arith.constant 0 : i32
    %c0_i32_1 = arith.constant 0 : i32
    return %arg0, %c0_i32, %c0_i32_0 : i32, i32, i32
  }
  func.func @transform_9(%arg0: i32) -> (i32, i32, i32) {
    %c0_i32 = arith.constant 0 : i32
    %c0_i32_0 = arith.constant 0 : i32
    %c0_i32_1 = arith.constant 0 : i32
    return %arg0, %c0_i32, %c0_i32_0 : i32, i32, i32
  }
  func.func @transform_10(%arg0: i32) -> (i32, i32, i32) {
    %c0_i32 = arith.constant 0 : i32
    %c0_i32_0 = arith.constant 0 : i32
    %c0_i32_1 = arith.constant 0 : i32
    return %arg0, %c0_i32, %c0_i32_0 : i32, i32, i32
  }
  func.func @transform_11(%arg0: i32) -> (i32, i32) {
    %c0_i32 = arith.constant 0 : i32
    %c0_i32_0 = arith.constant 0 : i32
    %c0_i32_1 = arith.constant 0 : i32
    return %c0_i32, %c0_i32_0 : i32, i32
  }
  func.func @transform_12(%arg0: i32) -> (i32, i32) {
    %c0_i32 = arith.constant 0 : i32
    %c0_i32_0 = arith.constant 0 : i32
    %c0_i32_1 = arith.constant 0 : i32
    return %c0_i32, %c0_i32_0 : i32, i32
  }
}

</mosaic_0001>

<llo_original>
// kernel: eq.8
$region0: #{eq.8}
  %s0 = inlined_call_operand.vmem [shape: s32[2,8], index: 0, kind: input, shape index: {}]
  %s1 = inlined_call_operand.vmem [shape: s32[16], index: 1, kind: output, shape index: {}]
  $region1: #{eq.8} parent=0
    #allocation0 [shape = 'u8[4096]{0}', space=vmem, size = 0x1000, scoped, tag = 'scoped mem for output reshape']
    #allocation1 [shape = 'u8[4096]{0}', space=vmem, size = 0x1000, scoped, tag = 'scoped mem for input reshape']
    %s3 = sshllo.u32 0, 2
    %v4 = vld [vmem:[%s0] sm:%s3]
    %5 = vst [vmem:[#allocation1] sm:%s3] %v4
    %v6 = vld [vmem:[#allocation1] sm:$0x1]
    %vm7 = vcmask 64512
    %8 = vst.msk [vmem:[#allocation0] sm:$0x1] %vm7, %v6
    %s9 = scalar_lea.vmem [#allocation1], 1
    %v10 = vld [vmem:[%s9] sm:$0x1]
    %11 = vrot.lane.b32.xlu0 %v10, 8
    %v12 = vpop.permute.xlu0 %11
    %vm13 = vcmask 130112
    %14 = vst.msk [vmem:[#allocation0] sm:$0x1] %vm13, %v12
    %s16 = sshllo.u32 0, 1
    %v18 = vld [vmem:[#allocation0] sm:%s16]
    %s19 = sshllo.u32 0, 1
    %20 = vst [vmem:[%s1] sm:%s19] %v18

// kernel: llama2_t5_encoder_forward.1
$region0: #{llama2_t5_encoder_forward.1}
  #allocation0 [shape = 'u32[]', space=smem, size = 0x4, offset = 0x4, fixed_abs, tag = 'smem constant byte address 0x4 - core index']
  #allocation1 [shape = 'u32[144,128]{1,0:T(1,128)}', space=vmem, size = 0x12000, scoped, tag = 'internal scratch']
  #allocation2 [shape = 'f32[16,64]{1,0:T(8,128)}', space=vmem, size = 0x2000, scoped, tag = 'scratch operand']
  %s0 = inlined_call_operand.vmem [shape: s32[16,1], index: 0, kind: input, shape index: {}]
  %s1 = inlined_call_operand.vmem [shape: f32[16,1], index: 1, kind: input, shape index: {}]
  %s2 = inlined_call_operand.vmem [shape: f32[16,16], index: 2, kind: input, shape index: {}]
  %s3 = inlined_call_operand.vmem [shape: f32[16,64], index: 3, kind: input, shape index: {}]
  %s4 = inlined_call_operand.vmem [shape: f32[16,64], index: 4, kind: input, shape index: {}]
  %s5 = inlined_call_operand.vmem [shape: bf16[256,64], index: 5, kind: input, shape index: {}]
  %s6 = inlined_call_operand.vmem [shape: f32[2,2,64], index: 6, kind: input, shape index: {}]
  %s7 = inlined_call_operand.vmem [shape: bf16[2,64,192], index: 7, kind: input, shape index: {}]
  %s8 = inlined_call_operand.vmem [shape: bf16[2,64,64], index: 8, kind: input, shape index: {}]
  %s9 = inlined_call_operand.vmem [shape: bf16[2,64,384], index: 9, kind: input, shape index: {}]
  %s10 = inlined_call_operand.vmem [shape: bf16[2,192,64], index: 10, kind: input, shape index: {}]
  %s11 = inlined_call_operand.hbm [shape: f32[16,64], index: 11, kind: output, shape index: {0}]
  %s12 = inlined_call_operand.vmem [shape: f32[16,256], index: 12, kind: output, shape index: {1}]
  %13 = xla_tuple %s11, %s12
  %s14 = sld [smem:[#allocation0]]
  $region93: #{llama2_t5_encoder_forward.1} parent=0
    _
  %s16 = ssub.s32 1, %s14
  %s17 = scalar_select 0, %s16, %s14
  $region1: #{llama2_t5_encoder_forward.1} parent=0
    #allocation3 [shape = 'u8[8192]{0}', space=vmem, size = 0x2000, scoped, tag = 'output window, operand 0, single buffered']
    #allocation4 [shape = 's32[2]{0}', space=sflag, size = 0x8, scoped, tag = 'scoped memory for llama2_t5_encoder_forward.1']
    %18 = vsyncpa [#allocation4], 0
    loop: start=0, step=1, limit=4
    $region2: #{llama2_t5_encoder_forward.1} parent=1 // loop_pre_header
      _
    $region3: #{llama2_t5_encoder_forward.1} parent=1 // loop_header
      %s20 = sphi 0, %s24
      %p21 = scmp.ge.s32.totalorder %s20, 4
      %s28 = sphi 0, %s28
      %s30 = sphi 0, %s28
      %s31 = sphi 0, %s30
      %s45 = sphi 0, %s31
      %s49 = sphi 0, %s49
      %s51 = sphi 0, %s49
      %s52 = sphi 0, %s51
      %s66 = sphi 0, %s52
      %s70 = sphi 0, %s70
      %s72 = sphi 0, %s70
      %s73 = sphi 0, %s72
      %s87 = sphi 0, %s73
      %s91 = sphi 0, %s91
      %s93 = sphi 0, %s91
      %s94 = sphi 0, %s93
      %s108 = sphi 0, %s94
      %s112 = sphi 0, %s112
      %s114 = sphi 0, %s112
      %s115 = sphi 0, %s114
      %s129 = sphi 0, %s115
      %s133 = sphi 0, %s133
      %s135 = sphi 0, %s133
      %s136 = sphi 0, %s135
      %s150 = sphi 0, %s136
      %s156 = sphi 0, %s158
      %s159 = sphi 0, %s156
      %s160 = sphi 0, %s159
      %s176 = sphi 0, %s160
      %s182 = sphi 0, %s184
      %s185 = sphi 0, %s182
      %s186 = sphi 0, %s185
      %s202 = sphi 0, %s186
      %s208 = sphi 0, %s210
      %s211 = sphi 0, %s208
      %s212 = sphi 0, %s211
      %s228 = sphi 0, %s212
      %s234 = sphi 0, %s236
      %s237 = sphi 0, %s234
      %s238 = sphi 0, %s237
      %s254 = sphi 0, %s238
      %s260 = sphi 0, %s262
      %s263 = sphi 0, %s260
      %s264 = sphi 0, %s263
      %s280 = sphi 0, %s264
      %s284 = sphi 0, %s284
      %s286 = sphi 0, %s284
      %s287 = sphi 0, %s286
      %s301 = sphi 0, %s287
      %s305 = sphi 0, %s305
      %s307 = sphi 0, %s305
      %s308 = sphi 0, %s307
      %s322 = sphi 0, %s308
    $region4: #{llama2_t5_encoder_forward.1} parent=1 // loop_header_branch
      %23 = sbr.rel (%p21) target = $region8
    $region5: #{llama2_t5_encoder_forward.1} parent=1 // loop_body
      %s25 = ssub.s32 %s20, 1
      %s26 = ssub.s32 %s20, 2
      %s27 = sadd.s32 %s20, 1
      %s29 = sadd.s32 %s28, 1
      %p32 = scmp.eq.s32.totalorder %s20, 1
      %p33 = scmp.ne.s32.totalorder %s28, %s30
      %p34 = scmp.eq.s32.totalorder %s20, 0
      %p35 = por %p33, %p34
      %p36 = scmp.ne.s32.totalorder %s28, %s30
      %p37 = scmp.eq.s32.totalorder %s25, 1
      %p38 = por %p36, %p37
      %p39 = scmp.ne.s32.totalorder %s30, %s31
      %p40 = scmp.eq.s32.totalorder %s25, 0
      %p41 = por %p39, %p40
      %p42 = scmp.ne.s32.totalorder %s30, %s31
      %p43 = scmp.eq.s32.totalorder %s26, 1
      %p44 = por %p42, %p43
      %p46 = scmp.ne.s32.totalorder %s31, %s45
      %p47 = scmp.eq.s32.totalorder %s26, 0
      %p48 = por %p46, %p47
      %s50 = sadd.s32 %s49, 1
      %p53 = scmp.eq.s32.totalorder %s20, 1
      %p54 = scmp.ne.s32.totalorder %s49, %s51
      %p55 = scmp.eq.s32.totalorder %s20, 0
      %p56 = por %p54, %p55
      %p57 = scmp.ne.s32.totalorder %s49, %s51
      %p58 = scmp.eq.s32.totalorder %s25, 1
      %p59 = por %p57, %p58
      %p60 = scmp.ne.s32.totalorder %s51, %s52
      %p61 = scmp.eq.s32.totalorder %s25, 0
      %p62 = por %p60, %p61
      %p63 = scmp.ne.s32.totalorder %s51, %s52
      %p64 = scmp.eq.s32.totalorder %s26, 1
      %p65 = por %p63, %p64
      %p67 = scmp.ne.s32.totalorder %s52, %s66
      %p68 = scmp.eq.s32.totalorder %s26, 0
      %p69 = por %p67, %p68
      %s71 = sadd.s32 %s70, 1
      %p74 = scmp.eq.s32.totalorder %s20, 1
      %p75 = scmp.ne.s32.totalorder %s70, %s72
      %p76 = scmp.eq.s32.totalorder %s20, 0
      %p77 = por %p75, %p76
      %p78 = scmp.ne.s32.totalorder %s70, %s72
      %p79 = scmp.eq.s32.totalorder %s25, 1
      %p80 = por %p78, %p79
      %p81 = scmp.ne.s32.totalorder %s72, %s73
      %p82 = scmp.eq.s32.totalorder %s25, 0
      %p83 = por %p81, %p82
      %p84 = scmp.ne.s32.totalorder %s72, %s73
      %p85 = scmp.eq.s32.totalorder %s26, 1
      %p86 = por %p84, %p85
      %p88 = scmp.ne.s32.totalorder %s73, %s87
      %p89 = scmp.eq.s32.totalorder %s26, 0
      %p90 = por %p88, %p89
      %s92 = sadd.s32 %s91, 1
      %p95 = scmp.eq.s32.totalorder %s20, 1
      %p96 = scmp.ne.s32.totalorder %s91, %s93
      %p97 = scmp.eq.s32.totalorder %s20, 0
      %p98 = por %p96, %p97
      %p99 = scmp.ne.s32.totalorder %s91, %s93
      %p100 = scmp.eq.s32.totalorder %s25, 1
      %p101 = por %p99, %p100
      %p102 = scmp.ne.s32.totalorder %s93, %s94
      %p103 = scmp.eq.s32.totalorder %s25, 0
      %p104 = por %p102, %p103
      %p105 = scmp.ne.s32.totalorder %s93, %s94
      %p106 = scmp.eq.s32.totalorder %s26, 1
      %p107 = por %p105, %p106
      %p109 = scmp.ne.s32.totalorder %s94, %s108
      %p110 = scmp.eq.s32.totalorder %s26, 0
      %p111 = por %p109, %p110
      %s113 = sadd.s32 %s112, 1
      %p116 = scmp.eq.s32.totalorder %s20, 1
      %p117 = scmp.ne.s32.totalorder %s112, %s114
      %p118 = scmp.eq.s32.totalorder %s20, 0
      %p119 = por %p117, %p118
      %p120 = scmp.ne.s32.totalorder %s112, %s114
      %p121 = scmp.eq.s32.totalorder %s25, 1
      %p122 = por %p120, %p121
      %p123 = scmp.ne.s32.totalorder %s114, %s115
      %p124 = scmp.eq.s32.totalorder %s25, 0
      %p125 = por %p123, %p124
      %p126 = scmp.ne.s32.totalorder %s114, %s115
      %p127 = scmp.eq.s32.totalorder %s26, 1
      %p128 = por %p126, %p127
      %p130 = scmp.ne.s32.totalorder %s115, %s129
      %p131 = scmp.eq.s32.totalorder %s26, 0
      %p132 = por %p130, %p131
      %s134 = sadd.s32 %s133, 1
      %p137 = scmp.eq.s32.totalorder %s20, 1
      %p138 = scmp.ne.s32.totalorder %s133, %s135
      %p139 = scmp.eq.s32.totalorder %s20, 0
      %p140 = por %p138, %p139
      %p141 = scmp.ne.s32.totalorder %s133, %s135
      %p142 = scmp.eq.s32.totalorder %s25, 1
      %p143 = por %p141, %p142
      %p144 = scmp.ne.s32.totalorder %s135, %s136
      %p145 = scmp.eq.s32.totalorder %s25, 0
      %p146 = por %p144, %p145
      %p147 = scmp.ne.s32.totalorder %s135, %s136
      %p148 = scmp.eq.s32.totalorder %s26, 1
      %p149 = por %p147, %p148
      %p151 = scmp.ne.s32.totalorder %s136, %s150
      %p152 = scmp.eq.s32.totalorder %s26, 0
      %p153 = por %p151, %p152
      %s154 = ssub.s32 %s20, %s27
      %p155 = scmp.eq.s32.totalorder %s154, 0
      %s157 = sadd.s32 %s156, 1
      %s158 = scalar_select %p155, %s156, %s157
      %p161 = pneg %p155
      %p162 = scmp.eq.s32.totalorder %s20, 1
      %p163 = por %p161, %p162
      %p164 = scmp.ne.s32.totalorder %s156, %s159
      %p165 = scmp.eq.s32.totalorder %s20, 0
      %p166 = por %p164, %p165
      %p167 = scmp.ne.s32.totalorder %s156, %s159
      %p168 = scmp.eq.s32.totalorder %s25, 1
      %p169 = por %p167, %p168
      %p170 = scmp.ne.s32.totalorder %s159, %s160
      %p171 = scmp.eq.s32.totalorder %s25, 0
      %p172 = por %p170, %p171
      %p173 = scmp.ne.s32.totalorder %s159, %s160
      %p174 = scmp.eq.s32.totalorder %s26, 1
      %p175 = por %p173, %p174
      %p177 = scmp.ne.s32.totalorder %s160, %s176
      %p178 = scmp.eq.s32.totalorder %s26, 0
      %p179 = por %p177, %p178
      %s180 = ssub.s32 %s20, %s27
      %p181 = scmp.eq.s32.totalorder %s180, 0
      %s183 = sadd.s32 %s182, 1
      %s184 = scalar_select %p181, %s182, %s183
      %p187 = pneg %p181
      %p188 = scmp.eq.s32.totalorder %s20, 1
      %p189 = por %p187, %p188
      %p190 = scmp.ne.s32.totalorder %s182, %s185
      %p191 = scmp.eq.s32.totalorder %s20, 0
      %p192 = por %p190, %p191
      %p193 = scmp.ne.s32.totalorder %s182, %s185
      %p194 = scmp.eq.s32.totalorder %s25, 1
      %p195 = por %p193, %p194
      %p196 = scmp.ne.s32.totalorder %s185, %s186
      %p197 = scmp.eq.s32.totalorder %s25, 0
      %p198 = por %p196, %p197
      %p199 = scmp.ne.s32.totalorder %s185, %s186
      %p200 = scmp.eq.s32.totalorder %s26, 1
      %p201 = por %p199, %p200
      %p203 = scmp.ne.s32.totalorder %s186, %s202
      %p204 = scmp.eq.s32.totalorder %s26, 0
      %p205 = por %p203, %p204
      %s206 = ssub.s32 %s20, %s27
      %p207 = scmp.eq.s32.totalorder %s206, 0
      %s209 = sadd.s32 %s208, 1
      %s210 = scalar_select %p207, %s208, %s209
      %p213 = pneg %p207
      %p214 = scmp.eq.s32.totalorder %s20, 1
      %p215 = por %p213, %p214
      %p216 = scmp.ne.s32.totalorder %s208, %s211
      %p217 = scmp.eq.s32.totalorder %s20, 0
      %p218 = por %p216, %p217
      %p219 = scmp.ne.s32.totalorder %s208, %s211
      %p220 = scmp.eq.s32.totalorder %s25, 1
      %p221 = por %p219, %p220
      %p222 = scmp.ne.s32.totalorder %s211, %s212
      %p223 = scmp.eq.s32.totalorder %s25, 0
      %p224 = por %p222, %p223
      %p225 = scmp.ne.s32.totalorder %s211, %s212
      %p226 = scmp.eq.s32.totalorder %s26, 1
      %p227 = por %p225, %p226
      %p229 = scmp.ne.s32.totalorder %s212, %s228
      %p230 = scmp.eq.s32.totalorder %s26, 0
      %p231 = por %p229, %p230
      %s232 = ssub.s32 %s20, %s27
      %p233 = scmp.eq.s32.totalorder %s232, 0
      %s235 = sadd.s32 %s234, 1
      %s236 = scalar_select %p233, %s234, %s235
      %p239 = pneg %p233
      %p240 = scmp.eq.s32.totalorder %s20, 1
      %p241 = por %p239, %p240
      %p242 = scmp.ne.s32.totalorder %s234, %s237
      %p243 = scmp.eq.s32.totalorder %s20, 0
      %p244 = por %p242, %p243
      %p245 = scmp.ne.s32.totalorder %s234, %s237
      %p246 = scmp.eq.s32.totalorder %s25, 1
      %p247 = por %p245, %p246
      %p248 = scmp.ne.s32.totalorder %s237, %s238
      %p249 = scmp.eq.s32.totalorder %s25, 0
      %p250 = por %p248, %p249
      %p251 = scmp.ne.s32.totalorder %s237, %s238
      %p252 = scmp.eq.s32.totalorder %s26, 1
      %p253 = por %p251, %p252
      %p255 = scmp.ne.s32.totalorder %s238, %s254
      %p256 = scmp.eq.s32.totalorder %s26, 0
      %p257 = por %p255, %p256
      %s258 = ssub.s32 %s20, %s27
      %p259 = scmp.eq.s32.totalorder %s258, 0
      %s261 = sadd.s32 %s260, 1
      %s262 = scalar_select %p259, %s260, %s261
      %p265 = pneg %p259
      %p266 = scmp.eq.s32.totalorder %s20, 1
      %p267 = por %p265, %p266
      %p268 = scmp.ne.s32.totalorder %s260, %s263
      %p269 = scmp.eq.s32.totalorder %s20, 0
      %p270 = por %p268, %p269
      %p271 = scmp.ne.s32.totalorder %s260, %s263
      %p272 = scmp.eq.s32.totalorder %s25, 1
      %p273 = por %p271, %p272
      %p274 = scmp.ne.s32.totalorder %s263, %s264
      %p275 = scmp.eq.s32.totalorder %s25, 0
      %p276 = por %p274, %p275
      %p277 = scmp.ne.s32.totalorder %s263, %s264
      %p278 = scmp.eq.s32.totalorder %s26, 1
      %p279 = por %p277, %p278
      %p281 = scmp.ne.s32.totalorder %s264, %s280
      %p282 = scmp.eq.s32.totalorder %s26, 0
      %p283 = por %p281, %p282
      %s285 = sadd.s32 %s284, 1
      %p288 = scmp.eq.s32.totalorder %s20, 1
      %p289 = scmp.ne.s32.totalorder %s284, %s286
      %p290 = scmp.eq.s32.totalorder %s20, 0
      %p291 = por %p289, %p290
      %p292 = scmp.ne.s32.totalorder %s284, %s286
      %p293 = scmp.eq.s32.totalorder %s25, 1
      %p294 = por %p292, %p293
      %p295 = scmp.ne.s32.totalorder %s286, %s287
      %p296 = scmp.eq.s32.totalorder %s25, 0
      %p297 = por %p295, %p296
      %p298 = scmp.ne.s32.totalorder %s286, %s287
      %p299 = scmp.eq.s32.totalorder %s26, 1
      %p300 = por %p298, %p299
      %p302 = scmp.ne.s32.totalorder %s287, %s301
      %p303 = scmp.eq.s32.totalorder %s26, 0
      %p304 = por %p302, %p303
      %s306 = sadd.s32 %s305, 1
      %p309 = scmp.eq.s32.totalorder %s20, 1
      %p310 = scmp.ne.s32.totalorder %s305, %s307
      %p311 = scmp.eq.s32.totalorder %s20, 0
      %p312 = por %p310, %p311
      %p313 = scmp.ne.s32.totalorder %s305, %s307
      %p314 = scmp.eq.s32.totalorder %s25, 1
      %p315 = por %p313, %p314
      %p316 = scmp.ne.s32.totalorder %s307, %s308
      %p317 = scmp.eq.s32.totalorder %s25, 0
      %p318 = por %p316, %p317
      %p319 = scmp.ne.s32.totalorder %s307, %s308
      %p320 = scmp.eq.s32.totalorder %s26, 1
      %p321 = por %p319, %p320
      %p323 = scmp.ne.s32.totalorder %s308, %s322
      %p324 = scmp.eq.s32.totalorder %s26, 0
      %p325 = por %p323, %p324
      %p326 = scmp.le.s32.totalorder 1, %s20
      %p327 = scmp.lt.s32.totalorder %s20, 3
      %p328 = pnand %p326, %p327
      %p329 = pneg %p328
      // Predicated region
      $region9: #{llama2_t5_encoder_forward.1} parent=5 // pred_check
        _
      $region10: #{llama2_t5_encoder_forward.1} parent=5 // pred_check_branch
        %331 = sbr.rel (%p328) target = $region12
      $region11: #{llama2_t5_encoder_forward.1} parent=5 // pred_region
        %s332 = ssub.s32 %s20, 1
        // Predicated region
        $region13: #{llama2_t5_encoder_forward.1} parent=11 // pred_check
          %p333 = pneg %p41
        $region14: #{llama2_t5_encoder_forward.1} parent=11 // pred_check_branch
          %335 = sbr.rel (%p333) target = $region16
        $region15: #{llama2_t5_encoder_forward.1} parent=11 // pred_region
          _
        $region16: #{llama2_t5_encoder_forward.1} parent=11 // pred_fallthru
          _
        // Predicated region
        $region17: #{llama2_t5_encoder_forward.1} parent=11 // pred_check
          %p336 = pneg %p62
        $region18: #{llama2_t5_encoder_forward.1} parent=11 // pred_check_branch
          %338 = sbr.rel (%p336) target = $region20
        $region19: #{llama2_t5_encoder_forward.1} parent=11 // pred_region
          _
        $region20: #{llama2_t5_encoder_forward.1} parent=11 // pred_fallthru
          _
        // Predicated region
        $region21: #{llama2_t5_encoder_forward.1} parent=11 // pred_check
          %p339 = pneg %p83
        $region22: #{llama2_t5_encoder_forward.1} parent=11 // pred_check_branch
          %341 = sbr.rel (%p339) target = $region24
        $region23: #{llama2_t5_encoder_forward.1} parent=11 // pred_region
          _
        $region24: #{llama2_t5_encoder_forward.1} parent=11 // pred_fallthru
          _
        // Predicated region
        $region25: #{llama2_t5_encoder_forward.1} parent=11 // pred_check
          %p342 = pneg %p104
        $region26: #{llama2_t5_encoder_forward.1} parent=11 // pred_check_branch
          %344 = sbr.rel (%p342) target = $region28
        $region27: #{llama2_t5_encoder_forward.1} parent=11 // pred_region
          _
        $region28: #{llama2_t5_encoder_forward.1} parent=11 // pred_fallthru
          _
        // Predicated region
        $region29: #{llama2_t5_encoder_forward.1} parent=11 // pred_check
          %p345 = pneg %p125
        $region30: #{llama2_t5_encoder_forward.1} parent=11 // pred_check_branch
          %347 = sbr.rel (%p345) target = $region32
        $region31: #{llama2_t5_encoder_forward.1} parent=11 // pred_region
          _
        $region32: #{llama2_t5_encoder_forward.1} parent=11 // pred_fallthru
          _
        // Predicated region
        $region33: #{llama2_t5_encoder_forward.1} parent=11 // pred_check
          %p348 = pneg %p146
        $region34: #{llama2_t5_encoder_forward.1} parent=11 // pred_check_branch
          %350 = sbr.rel (%p348) target = $region36
        $region35: #{llama2_t5_encoder_forward.1} parent=11 // pred_region
          _
        $region36: #{llama2_t5_encoder_forward.1} parent=11 // pred_fallthru
          _
      $region12: #{llama2_t5_encoder_forward.1} parent=5 // pred_fallthru
        _
      %p351 = scmp.lt.s32.totalorder %s20, 2
      // Predicated region
      $region37: #{llama2_t5_encoder_forward.1} parent=5 // pred_check
        %p352 = pneg %p351
      $region38: #{llama2_t5_encoder_forward.1} parent=5 // pred_check_branch
        %354 = sbr.rel (%p352) target = $region40
      $region39: #{llama2_t5_encoder_forward.1} parent=5 // pred_region
        // Predicated region
        $region41: #{llama2_t5_encoder_forward.1} parent=39 // pred_check
          %p355 = pneg %p166
        $region42: #{llama2_t5_encoder_forward.1} parent=39 // pred_check_branch
          %357 = sbr.rel (%p355) target = $region44
        $region43: #{llama2_t5_encoder_forward.1} parent=39 // pred_region
          %p358 = scmp.lt.s32.totalorder %s20, 1
          %s359 = scalar_select %p358, %s20, 1
          %s360 = smul.addr %s359, 2
          %s361 = scalar_lea.vmem %s6, %s360
        $region44: #{llama2_t5_encoder_forward.1} parent=39 // pred_fallthru
          _
        // Predicated region
        $region45: #{llama2_t5_encoder_forward.1} parent=39 // pred_check
          %p362 = pneg %p192
        $region46: #{llama2_t5_encoder_forward.1} parent=39 // pred_check_branch
          %364 = sbr.rel (%p362) target = $region48
        $region47: #{llama2_t5_encoder_forward.1} parent=39 // pred_region
          %p365 = scmp.lt.s32.totalorder %s20, 1
          %s366 = scalar_select %p365, %s20, 1
          %s367 = smul.addr %s366, 16
          %s368 = smul.addr %s367, 4
          %s369 = scalar_lea.vmem %s7, %s368
        $region48: #{llama2_t5_encoder_forward.1} parent=39 // pred_fallthru
          _
        // Predicated region
        $region49: #{llama2_t5_encoder_forward.1} parent=39 // pred_check
          %p370 = pneg %p218
        $region50: #{llama2_t5_encoder_forward.1} parent=39 // pred_check_branch
          %372 = sbr.rel (%p370) target = $region52
        $region51: #{llama2_t5_encoder_forward.1} parent=39 // pred_region
          %p373 = scmp.lt.s32.totalorder %s20, 1
          %s374 = scalar_select %p373, %s20, 1
          %s375 = smul.addr %s374, 8
          %s376 = smul.addr %s375, 4
          %s377 = scalar_lea.vmem %s8, %s376
        $region52: #{llama2_t5_encoder_forward.1} parent=39 // pred_fallthru
          _
        // Predicated region
        $region53: #{llama2_t5_encoder_forward.1} parent=39 // pred_check
          %p378 = pneg %p244
        $region54: #{llama2_t5_encoder_forward.1} parent=39 // pred_check_branch
          %380 = sbr.rel (%p378) target = $region56
        $region55: #{llama2_t5_encoder_forward.1} parent=39 // pred_region
          %p381 = scmp.lt.s32.totalorder %s20, 1
          %s382 = scalar_select %p381, %s20, 1
          %s383 = smul.addr %s382, 24
          %s384 = smul.addr %s383, 4
          %s385 = scalar_lea.vmem %s9, %s384
        $region56: #{llama2_t5_encoder_forward.1} parent=39 // pred_fallthru
          _
        // Predicated region
        $region57: #{llama2_t5_encoder_forward.1} parent=39 // pred_check
          %p386 = pneg %p270
        $region58: #{llama2_t5_encoder_forward.1} parent=39 // pred_check_branch
          %388 = sbr.rel (%p386) target = $region60
        $region59: #{llama2_t5_encoder_forward.1} parent=39 // pred_region
          %p389 = scmp.lt.s32.totalorder %s20, 1
          %s390 = scalar_select %p389, %s20, 1
          %s391 = smul.addr %s390, 24
          %s392 = smul.addr %s391, 4
          %s393 = scalar_lea.vmem %s10, %s392
        $region60: #{llama2_t5_encoder_forward.1} parent=39 // pred_fallthru
          _
      $region40: #{llama2_t5_encoder_forward.1} parent=5 // pred_fallthru
        _
      %p394 = scmp.le.s32.totalorder 1, %s20
      %p395 = scmp.lt.s32.totalorder %s20, 3
      %p396 = pnand %p394, %p395
      %p397 = pneg %p396
      // Predicated region
      $region61: #{llama2_t5_encoder_forward.1} parent=5 // pred_check
        _
      $region62: #{llama2_t5_encoder_forward.1} parent=5 // pred_check_branch
        %399 = sbr.rel (%p396) target = $region64
      $region63: #{llama2_t5_encoder_forward.1} parent=5 // pred_region
        %s400 = ssub.s32 %s20, 1
        %p401 = pneg %p41
        %p402 = pneg %p38
        %p403 = pneg %p62
        %p404 = pneg %p59
        %p405 = pneg %p83
        %p406 = pneg %p80
        %p407 = pneg %p104
        %p408 = pneg %p101
        %p409 = pneg %p125
        %p410 = pneg %p122
        %p411 = pneg %p146
        %p412 = pneg %p143
        %p413 = scmp.lt.s32.totalorder %s25, 1
        %s414 = scalar_select %p413, %s25, 1
        %s415 = smul.addr %s414, 2
        %s416 = scalar_lea.vmem %s6, %s415
        %p417 = pneg %p172
        %p418 = pneg %p169
        %p419 = scmp.lt.s32.totalorder %s25, 1
        %s420 = scalar_select %p419, %s25, 1
        %s421 = smul.addr %s420, 16
        %s422 = smul.addr %s421, 4
        %s423 = scalar_lea.vmem %s7, %s422
        %p424 = pneg %p198
        %p425 = pneg %p195
        %p426 = scmp.lt.s32.totalorder %s25, 1
        %s427 = scalar_select %p426, %s25, 1
        %s428 = smul.addr %s427, 8
        %s429 = smul.addr %s428, 4
        %s430 = scalar_lea.vmem %s8, %s429
        %p431 = pneg %p224
        %p432 = pneg %p221
        %p433 = scmp.lt.s32.totalorder %s25, 1
        %s434 = scalar_select %p433, %s25, 1
        %s435 = smul.addr %s434, 24
        %s436 = smul.addr %s435, 4
        %s437 = scalar_lea.vmem %s9, %s436
        %p438 = pneg %p250
        %p439 = pneg %p247
        %p440 = scmp.lt.s32.totalorder %s25, 1
        %s441 = scalar_select %p440, %s25, 1
        %s442 = smul.addr %s441, 24
        %s443 = smul.addr %s442, 4
        %s444 = scalar_lea.vmem %s10, %s443
        %p445 = pneg %p276
        %p446 = pneg %p273
        %p447 = pneg %p297
        %p448 = pneg %p294
        %p449 = pneg %p318
        %p450 = pneg %p315
        %p451 = scmp.lt.s32.totalorder %s25, 1
        %s452 = scalar_select %p451, %s25, 1
        %s453 = smul.addr %s452, 2
        %s454 = scalar_lea.vmem %s6, %s453
        %p455 = scmp.lt.s32.totalorder %s25, 1
        %s456 = scalar_select %p455, %s25, 1
        %s457 = smul.addr %s456, 16
        %s458 = smul.addr %s457, 4
        %s459 = scalar_lea.vmem %s7, %s458
        %p460 = scmp.lt.s32.totalorder %s25, 1
        %s461 = scalar_select %p460, %s25, 1
        %s462 = smul.addr %s461, 8
        %s463 = smul.addr %s462, 4
        %s464 = scalar_lea.vmem %s8, %s463
        %p465 = scmp.lt.s32.totalorder %s25, 1
        %s466 = scalar_select %p465, %s25, 1
        %s467 = smul.addr %s466, 24
        %s468 = smul.addr %s467, 4
        %s469 = scalar_lea.vmem %s9, %s468
        %p470 = scmp.lt.s32.totalorder %s25, 1
        %s471 = scalar_select %p470, %s25, 1
        %s472 = smul.addr %s471, 24
        %s473 = smul.addr %s472, 4
        %s474 = scalar_lea.vmem %s10, %s473
        %p476 = scmp.eq.s32.totalorder %s25, 0
        // Predicated region
        $region65: #{llama2_t5_encoder_forward.1} parent=63 // pred_check
          %p477 = pneg %p476
        $region66: #{llama2_t5_encoder_forward.1} parent=63 // pred_check_branch
          %479 = sbr.rel (%p477) target = $region68
        $region67: #{llama2_t5_encoder_forward.1} parent=63 // pred_region
          %v480 = vld [vmem:[%s0] sm:$0xff]
          %v481 = vld [vmem:[%s0 + $0x8] sm:$0xff]
          %v482 = vlaneseq
          %v483 = vand.u32 %v482, 127
          %v484 = vadd.s32 %v483, 128
          %485 = vset.pattern.permute.xlu0 0
          %486 = vperm.xlu0 %485, %v480
          %v487 = vpop.permute.xlu0 %486
          %488 = vset.pattern.permute.xlu0 0
          %489 = vperm.xlu0 %488, %v481
          %v490 = vpop.permute.xlu0 %489
          %vm491 = vcmp.eq.s32.totalorder %v483, %v487
          %vm492 = vcmp.eq.s32.totalorder %v484, %v487
          %vm493 = vcmp.eq.s32.totalorder %v483, %v490
          %vm494 = vcmp.eq.s32.totalorder %v484, %v490
          %v495 = vsel %vm491, 1.0, 0.0
          %v496 = vsel %vm492, 1.0, 0.0
          %v497 = vsel %vm493, 1.0, 0.0
          %v498 = vsel %vm494, 1.0, 0.0
          %v499 = vpack.c.bf16 %v497, %v495
          %v500 = vpack.c.bf16 %v498, %v496
          %v501 = vld [vmem:[%s5] sm:$0xf]
          %v502 = vld [vmem:[%s5 + $0x4] sm:$0xf]
          %v503 = vld [vmem:[%s5 + $0x8] sm:$0xf]
          %v504 = vld [vmem:[%s5 + $0xc] sm:$0xf]
          %v505 = vld [vmem:[%s5 + $0x10] sm:$0xf]
          %v506 = vld [vmem:[%s5 + $0x14] sm:$0xf]
          %v507 = vld [vmem:[%s5 + $0x18] sm:$0xf]
          %v508 = vld [vmem:[%s5 + $0x1c] sm:$0xf]
          %v509 = vld [vmem:[%s5 + $0x20] sm:$0xf]
          %v510 = vld [vmem:[%s5 + $0x24] sm:$0xf]
          %v511 = vld [vmem:[%s5 + $0x28] sm:$0xf]
          %v512 = vld [vmem:[%s5 + $0x2c] sm:$0xf]
          %v513 = vld [vmem:[%s5 + $0x30] sm:$0xf]
          %v514 = vld [vmem:[%s5 + $0x34] sm:$0xf]
          %v515 = vld [vmem:[%s5 + $0x38] sm:$0xf]
          %v516 = vld [vmem:[%s5 + $0x3c] sm:$0xf]
          %v517 = vld [vmem:[%s5 + $0x40] sm:$0xf]
          %v518 = vld [vmem:[%s5 + $0x44] sm:$0xf]
          %v519 = vld [vmem:[%s5 + $0x48] sm:$0xf]
          %v520 = vld [vmem:[%s5 + $0x4c] sm:$0xf]
          %v521 = vld [vmem:[%s5 + $0x50] sm:$0xf]
          %v522 = vld [vmem:[%s5 + $0x54] sm:$0xf]
          %v523 = vld [vmem:[%s5 + $0x58] sm:$0xf]
          %v524 = vld [vmem:[%s5 + $0x5c] sm:$0xf]
          %v525 = vld [vmem:[%s5 + $0x60] sm:$0xf]
          %v526 = vld [vmem:[%s5 + $0x64] sm:$0xf]
          %v527 = vld [vmem:[%s5 + $0x68] sm:$0xf]
          %v528 = vld [vmem:[%s5 + $0x6c] sm:$0xf]
          %v529 = vld [vmem:[%s5 + $0x70] sm:$0xf]
          %v530 = vld [vmem:[%s5 + $0x74] sm:$0xf]
          %v531 = vld [vmem:[%s5 + $0x78] sm:$0xf]
          %v532 = vld [vmem:[%s5 + $0x7c] sm:$0xf]
          %v565 = vunpack.c.l.b16 %v501
          %v566 = vunpack.c.l.b16 %v502
          %v567 = vunpack.c.l.b16 %v503
          %v568 = vunpack.c.l.b16 %v504
          %v569 = vunpack.c.l.b16 %v505
          %v570 = vunpack.c.l.b16 %v506
          %v571 = vunpack.c.l.b16 %v507
          %v572 = vunpack.c.l.b16 %v508
          %v573 = vunpack.c.l.b16 %v509
          %v574 = vunpack.c.l.b16 %v510
          %v575 = vunpack.c.l.b16 %v511
          %v576 = vunpack.c.l.b16 %v512
          %v577 = vunpack.c.l.b16 %v513
          %v578 = vunpack.c.l.b16 %v514
          %v579 = vunpack.c.l.b16 %v515
          %v580 = vunpack.c.l.b16 %v516
          %v581 = vunpack.c.l.b16 %v517
          %v582 = vunpack.c.l.b16 %v518
          %v583 = vunpack.c.l.b16 %v519
          %v584 = vunpack.c.l.b16 %v520
          %v585 = vunpack.c.l.b16 %v521
          %v586 = vunpack.c.l.b16 %v522
          %v587 = vunpack.c.l.b16 %v523
          %v588 = vunpack.c.l.b16 %v524
          %v589 = vunpack.c.l.b16 %v525
          %v590 = vunpack.c.l.b16 %v526
          %v591 = vunpack.c.l.b16 %v527
          %v592 = vunpack.c.l.b16 %v528
          %v593 = vunpack.c.l.b16 %v529
          %v594 = vunpack.c.l.b16 %v530
          %v595 = vunpack.c.l.b16 %v531
          %v596 = vunpack.c.l.b16 %v532
          %v597 = vpack.c.b16 %v566, %v565
          %v598 = vpack.c.b16 %v568, %v567
          %v599 = vpack.c.b16 %v570, %v569
          %v600 = vpack.c.b16 %v572, %v571
          %v601 = vpack.c.b16 %v574, %v573
          %v602 = vpack.c.b16 %v576, %v575
          %v603 = vpack.c.b16 %v578, %v577
          %v604 = vpack.c.b16 %v580, %v579
          %v605 = vpack.c.b16 %v582, %v581
          %v606 = vpack.c.b16 %v584, %v583
          %v607 = vpack.c.b16 %v586, %v585
          %v608 = vpack.c.b16 %v588, %v587
          %v609 = vpack.c.b16 %v590, %v589
          %v610 = vpack.c.b16 %v592, %v591
          %v611 = vpack.c.b16 %v594, %v593
          %v612 = vpack.c.b16 %v596, %v595
          %629 = vmatprep.subr.bf16.mxu0 0
          %630 = vmatpush1.bf16.msra.mxu0 %v597
          %631 = vmatprep.subr.bf16.mxu0 0
          %632 = vmatpush1.bf16.msra.mxu0 %v598
          %633 = vmatprep.subr.bf16.mxu0 0
          %634 = vmatpush1.bf16.msra.mxu0 %v599
          %635 = vmatprep.subr.bf16.mxu0 0
          %636 = vmatpush1.bf16.msra.mxu0 %v600
          %637 = vmatprep.subr.bf16.mxu0 0
          %638 = vmatpush1.bf16.msra.mxu0 %v601
          %639 = vmatprep.subr.bf16.mxu0 0
          %640 = vmatpush1.bf16.msra.mxu0 %v602
          %641 = vmatprep.subr.bf16.mxu0 0
          %642 = vmatpush1.bf16.msra.mxu0 %v603
          %643 = vmatprep.subr.bf16.mxu0 0
          %644 = vmatpush1.bf16.msra.mxu0 %v604
          %645 = vmatprep.subr.bf16.mxu0 0
          %646 = vmatpush1.bf16.msra.mxu0 %v605
          %647 = vmatprep.subr.bf16.mxu0 0
          %648 = vmatpush1.bf16.msra.mxu0 %v606
          %649 = vmatprep.subr.bf16.mxu0 0
          %650 = vmatpush1.bf16.msra.mxu0 %v607
          %651 = vmatprep.subr.bf16.mxu0 0
          %652 = vmatpush1.bf16.msra.mxu0 %v608
          %653 = vmatprep.subr.bf16.mxu0 0
          %654 = vmatpush1.bf16.msra.mxu0 %v609
          %655 = vmatprep.subr.bf16.mxu0 0
          %656 = vmatpush1.bf16.msra.mxu0 %v610
          %657 = vmatprep.subr.bf16.mxu0 0
          %658 = vmatpush1.bf16.msra.mxu0 %v611
          %659 = vmatprep.subr.bf16.mxu0 0
          %660 = vmatpush1.bf16.msra.mxu0 %v612
          %661 = vmatprep.mubr.bf16.mxu0 %v500
          %662 = vmatmul.mubr.bf16.gmra.mrb[0].mxu0 %v499
          %v663 = vpop.f32.mrb[0].mxu0
          %v664 = vadd.f32 0.0, %v663
          %v665 = vpop.f32.mrb[0].mxu0
          %v666 = vpop.f32.mrb[0].mxu0
          %v667 = vadd.f32 0.0, %v666
          %v668 = vpop.f32.mrb[0].mxu0
          %669 = vdwg.mxu0
          %v670 = vld [vmem:[%s1] sm:$0xff]
          %v671 = vld [vmem:[%s1 + $0x8] sm:$0xff]
          %673 = vset.pattern.permute.xlu0 0
          %674 = vperm.xlu0 %673, %v670
          %v675 = vpop.permute.xlu0 %674
          %678 = vset.pattern.permute.xlu0 0
          %679 = vperm.xlu0 %678, %v671
          %v680 = vpop.permute.xlu0 %679
          %v682 = vmul.f32 %v664, %v675
          %v683 = vmul.f32 %v667, %v680
          %vm684 = vcmask 523264
          %685 = vst.msk [vmem:[#allocation2] sm:$0xff] %vm684, %v682
          %686 = vst.msk [vmem:[#allocation2 + $0x8] sm:$0xff] %vm684, %v683
        $region68: #{llama2_t5_encoder_forward.1} parent=63 // pred_fallthru
          _
        %v687 = vld [vmem:[%s3] sm:$0xff]
        %v688 = vld [vmem:[%s3 + $0x8] sm:$0xff]
        %v689 = vld [vmem:[%s4] sm:$0xff]
        %v690 = vld [vmem:[%s4 + $0x8] sm:$0xff]
        %v691 = vld [vmem:[%s2] sm:$0xff]
        %v692 = vld [vmem:[%s2 + $0x8] sm:$0xff]
        %v693 = vlaneseq
        %v694 = vshrl.u32 %v693, 7
        %v695 = vadd.s32 %v694, 8
        %v696 = vadd.s32 %v694, 16
        %v697 = vadd.s32 %v694, 24
        %v698 = vadd.s32 %v694, 32
        %v699 = vadd.s32 %v694, 40
        %v700 = vadd.s32 %v694, 48
        %v701 = vadd.s32 %v694, 56
        %v702 = vlaneseq
        %v703 = vand.u32 %v702, 127
        %v704 = vshra.s32 %v694, 4
        %v705 = vshra.s32 %v695, 4
        %v706 = vshra.s32 %v696, 4
        %v707 = vshra.s32 %v697, 4
        %v708 = vshra.s32 %v698, 4
        %v709 = vshra.s32 %v699, 4
        %v710 = vshra.s32 %v700, 4
        %v711 = vshra.s32 %v701, 4
        %v712 = vshra.s32 %v703, 4
        %vm713 = vcmp.eq.s32.totalorder %v704, %v712
        %vm714 = vcmp.eq.s32.totalorder %v705, %v712
        %vm715 = vcmp.eq.s32.totalorder %v706, %v712
        %vm716 = vcmp.eq.s32.totalorder %v707, %v712
        %vm717 = vcmp.eq.s32.totalorder %v708, %v712
        %vm718 = vcmp.eq.s32.totalorder %v709, %v712
        %vm719 = vcmp.eq.s32.totalorder %v710, %v712
        %vm720 = vcmp.eq.s32.totalorder %v711, %v712
        %v721 = vand.u32 %v694, 15
        %v722 = vand.u32 %v695, 15
        %v723 = vand.u32 %v696, 15
        %v724 = vand.u32 %v697, 15
        %v725 = vand.u32 %v698, 15
        %v726 = vand.u32 %v699, 15
        %v727 = vand.u32 %v700, 15
        %v728 = vand.u32 %v701, 15
        %v729 = vand.u32 %v703, 15
        %v730 = vadd.s32 %v721, 8
        %v731 = vadd.s32 %v722, 8
        %v732 = vadd.s32 %v723, 8
        %v733 = vadd.s32 %v724, 8
        %v734 = vadd.s32 %v725, 8
        %v735 = vadd.s32 %v726, 8
        %v736 = vadd.s32 %v727, 8
        %v737 = vadd.s32 %v728, 8
        %vm738 = vcmp.eq.s32.totalorder %v729, %v730
        %vm739 = vcmp.eq.s32.totalorder %v729, %v731
        %vm740 = vcmp.eq.s32.totalorder %v729, %v732
        %vm741 = vcmp.eq.s32.totalorder %v729, %v733
        %vm742 = vcmp.eq.s32.totalorder %v729, %v734
        %vm743 = vcmp.eq.s32.totalorder %v729, %v735
        %vm744 = vcmp.eq.s32.totalorder %v729, %v736
        %vm745 = vcmp.eq.s32.totalorder %v729, %v737
        %vm746 = vmand %vm713, %vm738
        %vm747 = vmand %vm714, %vm739
        %vm748 = vmand %vm715, %vm740
        %vm749 = vmand %vm716, %vm741
        %vm750 = vmand %vm717, %vm742
        %vm751 = vmand %vm718, %vm743
        %vm752 = vmand %vm719, %vm744
        %vm753 = vmand %vm720, %vm745
        %v754 = vsel %vm746, 1.0, 0.0
        %v755 = vsel %vm747, 1.0, 0.0
        %v756 = vsel %vm748, 1.0, 0.0
        %v757 = vsel %vm749, 1.0, 0.0
        %v758 = vsel %vm750, 1.0, 0.0
        %v759 = vsel %vm751, 1.0, 0.0
        %v760 = vsel %vm752, 1.0, 0.0
        %v761 = vsel %vm753, 1.0, 0.0
        %v762 = vsub.s32 %v721, 8
        %v763 = vsub.s32 %v722, 8
        %v764 = vsub.s32 %v723, 8
        %v765 = vsub.s32 %v724, 8
        %v766 = vsub.s32 %v725, 8
        %v767 = vsub.s32 %v726, 8
        %v768 = vsub.s32 %v727, 8
        %v769 = vsub.s32 %v728, 8
        %vm770 = vcmp.eq.s32.totalorder %v729, %v762
        %vm771 = vcmp.eq.s32.totalorder %v729, %v763
        %vm772 = vcmp.eq.s32.totalorder %v729, %v764
        %vm773 = vcmp.eq.s32.totalorder %v729, %v765
        %vm774 = vcmp.eq.s32.totalorder %v729, %v766
        %vm775 = vcmp.eq.s32.totalorder %v729, %v767
        %vm776 = vcmp.eq.s32.totalorder %v729, %v768
        %vm777 = vcmp.eq.s32.totalorder %v729, %v769
        %vm778 = vmand %vm713, %vm770
        %vm779 = vmand %vm714, %vm771
        %vm780 = vmand %vm715, %vm772
        %vm781 = vmand %vm716, %vm773
        %vm782 = vmand %vm717, %vm774
        %vm783 = vmand %vm718, %vm775
        %vm784 = vmand %vm719, %vm776
        %vm785 = vmand %vm720, %vm777
        %v786 = vsel %vm778, 1.0, 0.0
        %v787 = vsel %vm779, 1.0, 0.0
        %v788 = vsel %vm780, 1.0, 0.0
        %v789 = vsel %vm781, 1.0, 0.0
        %v790 = vsel %vm782, 1.0, 0.0
        %v791 = vsel %vm783, 1.0, 0.0
        %v792 = vsel %vm784, 1.0, 0.0
        %v793 = vsel %vm785, 1.0, 0.0
        %v794 = vsub.f32 %v754, %v786
        %v795 = vsub.f32 %v755, %v787
        %v796 = vsub.f32 %v756, %v788
        %v797 = vsub.f32 %v757, %v789
        %v798 = vsub.f32 %v758, %v790
        %v799 = vsub.f32 %v759, %v791
        %v800 = vsub.f32 %v760, %v792
        %v801 = vsub.f32 %v761, %v793
        %v802 = vld [vmem:[#allocation2] sm:$0xff]
        %v803 = vld [vmem:[#allocation2 + $0x8] sm:$0xff]
        %v804 = vld [vmem:[%s454] sm:$0x1]
        %v805 = vmul.f32 %v802, %v802
        %v806 = vmul.f32 %v803, %v803
        %vm807 = vcmask 523264
        %v808 = vsel %vm807, %v805, 0.0
        %809 = vadd.xlane.f32.xlu0 %v808
        %v810 = vpop.xlane.xlu0 %809
        %v811 = vsel %vm807, %v806, 0.0
        %812 = vadd.xlane.f32.xlu0 %v811
        %v813 = vpop.xlane.xlu0 %812
        %v814 = vrcp.pop 64.0
        %v815 = vmul.f32 %v810, %v814
        %v816 = vmul.f32 %v813, %v814
        %v817 = vadd.f32 %v815, 1e-05
        %v818 = vadd.f32 %v816, 1e-05
        %v819 = vrsqrt.pop %v817
        %v820 = vrsqrt.pop %v818
        %v821 = vmul.f32 %v802, %v819
        %v822 = vmul.f32 %v803, %v820
        %v823 = vlaneseq
        %v824 = vshrl.u32 %v823, 7
        %v825 = vsub.s32 0, %v824
        %v826 = vrot.slane %v804, %v825
        %v827 = vmul.f32 %v821, %v826
        %v828 = vmul.f32 %v822, %v826
        %v829 = vpack.c.bf16 %v828, %v827
        %v830 = vld [vmem:[%s459] sm:$0xff]
        %v831 = vld [vmem:[%s459 + $0x8] sm:$0xff]
        %v832 = vld [vmem:[%s459 + $0x10] sm:$0xff]
        %v833 = vld [vmem:[%s459 + $0x18] sm:$0xff]
        %v834 = vld [vmem:[%s459 + $0x20] sm:$0xff]
        %v835 = vld [vmem:[%s459 + $0x28] sm:$0xff]
        %v836 = vld [vmem:[%s459 + $0x30] sm:$0xff]
        %v837 = vld [vmem:[%s459 + $0x38] sm:$0xff]
        %v846 = vunpack.c.l.b16 %v830
        %v847 = vunpack.c.h.b16 %v830
        %v848 = vunpack.c.l.b16 %v831
        %v849 = vunpack.c.h.b16 %v831
        %v850 = vunpack.c.l.b16 %v832
        %v851 = vunpack.c.h.b16 %v832
        %v852 = vunpack.c.l.b16 %v833
        %v853 = vunpack.c.h.b16 %v833
        %v854 = vunpack.c.l.b16 %v834
        %v855 = vunpack.c.h.b16 %v834
        %v856 = vunpack.c.l.b16 %v835
        %v857 = vunpack.c.h.b16 %v835
        %v858 = vunpack.c.l.b16 %v836
        %v859 = vunpack.c.h.b16 %v836
        %v860 = vunpack.c.l.b16 %v837
        %v861 = vunpack.c.h.b16 %v837
        %v862 = vpack.c.b16 %v848, %v846
        %v863 = vpack.c.b16 %v849, %v847
        %v864 = vpack.c.b16 %v852, %v850
        %v865 = vpack.c.b16 %v853, %v851
        %v866 = vpack.c.b16 %v856, %v854
        %v867 = vpack.c.b16 %v857, %v855
        %v868 = vpack.c.b16 %v860, %v858
        %v869 = vpack.c.b16 %v861, %v859
        %v879 = vsel %vm807, %v829, 0
        %881 = vmatprep.subr.bf16.mxu0 %v863
        %882 = vmatpush1.bf16.msra.mxu0 %v862
        %883 = vmatprep.subr.bf16.mxu0 %v865
        %884 = vmatpush1.bf16.msra.mxu0 %v864
        %885 = vmatprep.subr.bf16.mxu0 %v867
        %886 = vmatpush1.bf16.msra.mxu0 %v866
        %887 = vmatprep.subr.bf16.mxu0 %v869
        %888 = vmatpush1.bf16.msra.mxu0 %v868
        %889 = vmatprep.subr.bf16.mxu0 0
        %890 = vmatpush1.bf16.msra.mxu0 0
        %891 = vmatprep.subr.bf16.mxu0 0
        %892 = vmatpush1.bf16.msra.mxu0 0
        %893 = vmatprep.subr.bf16.mxu0 0
        %894 = vmatpush1.bf16.msra.mxu0 0
        %895 = vmatprep.subr.bf16.mxu0 0
        %896 = vmatpush1.bf16.msra.mxu0 0
        %897 = vmatprep.subr.bf16.mxu0 0
        %898 = vmatpush1.bf16.msra.mxu0 0
        %899 = vmatprep.subr.bf16.mxu0 0
        %900 = vmatpush1.bf16.msra.mxu0 0
        %901 = vmatprep.subr.bf16.mxu0 0
        %902 = vmatpush1.bf16.msra.mxu0 0
        %903 = vmatprep.subr.bf16.mxu0 0
        %904 = vmatpush1.bf16.msra.mxu0 0
        %905 = vmatprep.subr.bf16.mxu0 0
        %906 = vmatpush1.bf16.msra.mxu0 0
        %907 = vmatprep.subr.bf16.mxu0 0
        %908 = vmatpush1.bf16.msra.mxu0 0
        %909 = vmatprep.subr.bf16.mxu0 0
        %910 = vmatpush1.bf16.msra.mxu0 0
        %911 = vmatprep.subr.bf16.mxu0 0
        %912 = vmatpush1.bf16.msra.mxu0 0
        %913 = vmatprep.mubr.bf16.mxu0 0
        %914 = vmatmul.mubr.bf16.gmra.mrb[0].mxu0 %v879
        %v915 = vpop.f32.mrb[0].mxu0
        %v916 = vadd.f32 0.0, %v915
        %v917 = vpop.f32.mrb[0].mxu0
        %v918 = vadd.f32 0.0, %v917
        %v919 = vpop.f32.mrb[0].mxu0
        %v920 = vadd.f32 0.0, %v919
        %v921 = vpop.f32.mrb[0].mxu0
        %v922 = vadd.f32 0.0, %v921
        %923 = vdwg.mxu0
        %v924 = vmul.f32 %v916, %v687
        %v925 = vmul.f32 %v920, %v688
        %v927 = vsel %vm807, %v916, 0
        %v930 = vsel %vm807, %v920, 0
        %932 = vmatprep.subr.mxu0 0.0
        %933 = vmatpush1.msra.mxu0 %v794
        %934 = vmatprep.subr.mxu0 0.0
        %935 = vmatpush1.msra.mxu0 %v795
        %936 = vmatprep.subr.mxu0 0.0
        %937 = vmatpush1.msra.mxu0 %v796
        %938 = vmatprep.subr.mxu0 0.0
        %939 = vmatpush1.msra.mxu0 %v797
        %940 = vmatprep.subr.mxu0 0.0
        %941 = vmatpush1.msra.mxu0 %v798
        %942 = vmatprep.subr.mxu0 0.0
        %943 = vmatpush1.msra.mxu0 %v799
        %944 = vmatprep.subr.mxu0 0.0
        %945 = vmatpush1.msra.mxu0 %v800
        %946 = vmatprep.subr.mxu0 0.0
        %947 = vmatpush1.msra.mxu0 %v801
        %948 = vmatprep.subr.mxu0 0.0
        %949 = vmatpush1.msra.mxu0 0.0
        %950 = vmatprep.subr.mxu0 0.0
        %951 = vmatpush1.msra.mxu0 0.0
        %952 = vmatprep.subr.mxu0 0.0
        %953 = vmatpush1.msra.mxu0 0.0
        %954 = vmatprep.subr.mxu0 0.0
        %955 = vmatpush1.msra.mxu0 0.0
        %956 = vmatprep.subr.mxu0 0.0
        %957 = vmatpush1.msra.mxu0 0.0
        %958 = vmatprep.subr.mxu0 0.0
        %959 = vmatpush1.msra.mxu0 0.0
        %960 = vmatprep.subr.mxu0 0.0
        %961 = vmatpush1.msra.mxu0 0.0
        %962 = vmatprep.subr.mxu0 0.0
        %963 = vmatpush1.msra.mxu0 0.0
        %964 = vmatprep.subr.mxu0 0.0
        %965 = vmatpush1.msra.mxu0 0.0
        %966 = vmatprep.subr.mxu0 0.0
        %967 = vmatpush1.msra.mxu0 0.0
        %968 = vmatprep.subr.mxu0 0.0
        %969 = vmatpush1.msra.mxu0 0.0
        %970 = vmatprep.subr.mxu0 0.0
        %971 = vmatpush1.msra.mxu0 0.0
        %972 = vmatprep.subr.mxu0 0.0
        %973 = vmatpush1.msra.mxu0 0.0
        %974 = vmatprep.subr.mxu0 0.0
        %975 = vmatpush1.msra.mxu0 0.0
        %976 = vmatprep.subr.mxu0 0.0
        %977 = vmatpush1.msra.mxu0 0.0
        %978 = vmatprep.subr.mxu0 0.0
        %979 = vmatpush1.msra.mxu0 0.0
        %980 = vmatprep.subr.mxu0 0.0
        %981 = vmatpush1.msra.mxu0 0.0
        %982 = vmatprep.subr.mxu0 0.0
        %983 = vmatpush1.msra.mxu0 0.0
        %984 = vmatprep.subr.mxu0 0.0
        %985 = vmatpush1.msra.mxu0 0.0
        %986 = vmatprep.subr.mxu0 0.0
        %987 = vmatpush1.msra.mxu0 0.0
        %988 = vmatprep.subr.mxu0 0.0
        %989 = vmatpush1.msra.mxu0 0.0
        %990 = vmatprep.subr.mxu0 0.0
        %991 = vmatpush1.msra.mxu0 0.0
        %992 = vmatprep.subr.mxu0 0.0
        %993 = vmatpush1.msra.mxu0 0.0
        %994 = vmatprep.subr.mxu0 0.0
        %995 = vmatpush1.msra.mxu0 0.0
        %996 = vmatprep.mubr.f32.mxu0 0.0
        %997 = vmatmul.mubr.f32.gmra.mrb[0].mxu0 %v927
        %v998 = vpop.f32.mrb[0].mxu0
        %v999 = vadd.f32 0.0, %v998
        %v1000 = vpop.f32.mrb[0].mxu0
        %1001 = vmatprep.mubr.f32.mxu0 0.0
        %1002 = vmatmul.mubr.f32.gmra.mrb[0].mxu0 %v930
        %v1003 = vpop.f32.mrb[0].mxu0
        %v1004 = vadd.f32 0.0, %v1003
        %v1005 = vpop.f32.mrb[0].mxu0
        %1006 = vdwg.mxu0
        %v1007 = vmul.f32 %v999, %v689
        %v1008 = vmul.f32 %v1004, %v690
        %v1009 = vadd.f32 %v924, %v1007
        %v1010 = vadd.f32 %v925, %v1008
        %1013 = vrot.lane.b32.xlu0 %v687, 64
        %v1014 = vpop.permute.xlu0 %1013
        %1015 = vrot.lane.b32.xlu0 %v688, 64
        %v1016 = vpop.permute.xlu0 %1015
        %v1019 = vmul.f32 %v916, %v1014
        %v1020 = vmul.f32 %v920, %v1016
        %1021 = vrot.lane.b32.xlu0 %v916, 64
        %v1022 = vpop.permute.xlu0 %1021
        %1023 = vrot.lane.b32.xlu0 %v920, 64
        %v1024 = vpop.permute.xlu0 %1023
        %v1025 = vsel %vm807, %v1022, 0
        %v1027 = vsel %vm807, %v1024, 0
        %1029 = vmatprep.subr.mxu0 0.0
        %1030 = vmatpush1.msra.mxu0 %v794
        %1031 = vmatprep.subr.mxu0 0.0
        %1032 = vmatpush1.msra.mxu0 %v795
        %1033 = vmatprep.subr.mxu0 0.0
        %1034 = vmatpush1.msra.mxu0 %v796
        %1035 = vmatprep.subr.mxu0 0.0
        %1036 = vmatpush1.msra.mxu0 %v797
        %1037 = vmatprep.subr.mxu0 0.0
        %1038 = vmatpush1.msra.mxu0 %v798
        %1039 = vmatprep.subr.mxu0 0.0
        %1040 = vmatpush1.msra.mxu0 %v799
        %1041 = vmatprep.subr.mxu0 0.0
        %1042 = vmatpush1.msra.mxu0 %v800
        %1043 = vmatprep.subr.mxu0 0.0
        %1044 = vmatpush1.msra.mxu0 %v801
        %1045 = vmatprep.subr.mxu0 0.0
        %1046 = vmatpush1.msra.mxu0 0.0
        %1047 = vmatprep.subr.mxu0 0.0
        %1048 = vmatpush1.msra.mxu0 0.0
        %1049 = vmatprep.subr.mxu0 0.0
        %1050 = vmatpush1.msra.mxu0 0.0
        %1051 = vmatprep.subr.mxu0 0.0
        %1052 = vmatpush1.msra.mxu0 0.0
        %1053 = vmatprep.subr.mxu0 0.0
        %1054 = vmatpush1.msra.mxu0 0.0
        %1055 = vmatprep.subr.mxu0 0.0
        %1056 = vmatpush1.msra.mxu0 0.0
        %1057 = vmatprep.subr.mxu0 0.0
        %1058 = vmatpush1.msra.mxu0 0.0
        %1059 = vmatprep.subr.mxu0 0.0
        %1060 = vmatpush1.msra.mxu0 0.0
        %1061 = vmatprep.subr.mxu0 0.0
        %1062 = vmatpush1.msra.mxu0 0.0
        %1063 = vmatprep.subr.mxu0 0.0
        %1064 = vmatpush1.msra.mxu0 0.0
        %1065 = vmatprep.subr.mxu0 0.0
        %1066 = vmatpush1.msra.mxu0 0.0
        %1067 = vmatprep.subr.mxu0 0.0
        %1068 = vmatpush1.msra.mxu0 0.0
        %1069 = vmatprep.subr.mxu0 0.0
        %1070 = vmatpush1.msra.mxu0 0.0
        %1071 = vmatprep.subr.mxu0 0.0
        %1072 = vmatpush1.msra.mxu0 0.0
        %1073 = vmatprep.subr.mxu0 0.0
        %1074 = vmatpush1.msra.mxu0 0.0
        %1075 = vmatprep.subr.mxu0 0.0
        %1076 = vmatpush1.msra.mxu0 0.0
        %1077 = vmatprep.subr.mxu0 0.0
        %1078 = vmatpush1.msra.mxu0 0.0
        %1079 = vmatprep.subr.mxu0 0.0
        %1080 = vmatpush1.msra.mxu0 0.0
        %1081 = vmatprep.subr.mxu0 0.0
        %1082 = vmatpush1.msra.mxu0 0.0
        %1083 = vmatprep.subr.mxu0 0.0
        %1084 = vmatpush1.msra.mxu0 0.0
        %1085 = vmatprep.subr.mxu0 0.0
        %1086 = vmatpush1.msra.mxu0 0.0
        %1087 = vmatprep.subr.mxu0 0.0
        %1088 = vmatpush1.msra.mxu0 0.0
        %1089 = vmatprep.subr.mxu0 0.0
        %1090 = vmatpush1.msra.mxu0 0.0
        %1091 = vmatprep.subr.mxu0 0.0
        %1092 = vmatpush1.msra.mxu0 0.0
        %1093 = vmatprep.mubr.f32.mxu0 0.0
        %1094 = vmatmul.mubr.f32.gmra.mrb[0].mxu0 %v1025
        %v1095 = vpop.f32.mrb[0].mxu0
        %v1096 = vadd.f32 0.0, %v1095
        %v1097 = vpop.f32.mrb[0].mxu0
        %1098 = vmatprep.mubr.f32.mxu0 0.0
        %1099 = vmatmul.mubr.f32.gmra.mrb[0].mxu0 %v1027
        %v1100 = vpop.f32.mrb[0].mxu0
        %v1101 = vadd.f32 0.0, %v1100
        %v1102 = vpop.f32.mrb[0].mxu0
        %1103 = vdwg.mxu0
        %v1104 = vmul.f32 %v1096, %v689
        %v1105 = vmul.f32 %v1101, %v690
        %1108 = vrot.lane.b32.xlu0 %v1104, 64
        %v1109 = vpop.permute.xlu0 %1108
        %1110 = vrot.lane.b32.xlu0 %v1105, 64
        %v1111 = vpop.permute.xlu0 %1110
        %v1114 = vadd.f32 %v1019, %v1109
        %v1115 = vadd.f32 %v1020, %v1111
        %vm1116 = vcmp.eq.s32.totalorder %v712, 0
        %v1117 = vsel %vm1116, 1, 0
        %v1118 = vcvt.s32.f32 %v1117
        %v1119 = vmul.f32 %v1009, %v1118
        %v1120 = vmul.f32 %v1010, %v1118
        %1123 = vrot.lane.b32.xlu0 %v1114, 64
        %v1124 = vpop.permute.xlu0 %1123
        %1125 = vrot.lane.b32.xlu0 %v1115, 64
        %v1126 = vpop.permute.xlu0 %1125
        %v1128 = vsel %vm807, %v1119, 0
        %v1131 = vsel %vm807, %v1120, 0
        %v1133 = vsel %vm807, %v1124, 0
        %v1135 = vsel %vm807, %v1126, 0
        %1137 = vmatprep.subr.mxu0 0.0
        %1138 = vmatpush1.xpose.msra.mxu0 %v1133
        %1139 = vmatprep.subr.mxu0 0.0
        %1140 = vmatpush1.xpose.msra.mxu0 %v1135
        %1141 = vmatprep.subr.mxu0 0.0
        %1142 = vmatpush1.xpose.msra.mxu0 0.0
        %1143 = vmatprep.subr.mxu0 0.0
        %1144 = vmatpush1.xpose.msra.mxu0 0.0
        %1145 = vmatprep.subr.mxu0 0.0
        %1146 = vmatpush1.xpose.msra.mxu0 0.0
        %1147 = vmatprep.subr.mxu0 0.0
        %1148 = vmatpush1.xpose.msra.mxu0 0.0
        %1149 = vmatprep.subr.mxu0 0.0
        %1150 = vmatpush1.xpose.msra.mxu0 0.0
        %1151 = vmatprep.subr.mxu0 0.0
        %1152 = vmatpush1.xpose.msra.mxu0 0.0
        %1153 = vmatprep.subr.mxu0 0.0
        %1154 = vmatpush1.xpose.msra.mxu0 0.0
        %1155 = vmatprep.subr.mxu0 0.0
        %1156 = vmatpush1.xpose.msra.mxu0 0.0
        %1157 = vmatprep.subr.mxu0 0.0
        %1158 = vmatpush1.xpose.msra.mxu0 0.0
        %1159 = vmatprep.subr.mxu0 0.0
        %1160 = vmatpush1.xpose.msra.mxu0 0.0
        %1161 = vmatprep.subr.mxu0 0.0
        %1162 = vmatpush1.xpose.msra.mxu0 0.0
        %1163 = vmatprep.subr.mxu0 0.0
        %1164 = vmatpush1.xpose.msra.mxu0 0.0
        %1165 = vmatprep.subr.mxu0 0.0
        %1166 = vmatpush1.xpose.msra.mxu0 0.0
        %1167 = vmatprep.subr.mxu0 0.0
        %1168 = vmatpush1.xpose.msra.mxu0 0.0
        %1169 = vmatprep.subr.mxu0 0.0
        %1170 = vmatpush1.xpose.msra.mxu0 0.0
        %1171 = vmatprep.subr.mxu0 0.0
        %1172 = vmatpush1.xpose.msra.mxu0 0.0
        %1173 = vmatprep.subr.mxu0 0.0
        %1174 = vmatpush1.xpose.msra.mxu0 0.0
        %1175 = vmatprep.subr.mxu0 0.0
        %1176 = vmatpush1.xpose.msra.mxu0 0.0
        %1177 = vmatprep.subr.mxu0 0.0
        %1178 = vmatpush1.xpose.msra.mxu0 0.0
        %1179 = vmatprep.subr.mxu0 0.0
        %1180 = vmatpush1.xpose.msra.mxu0 0.0
        %1181 = vmatprep.subr.mxu0 0.0
        %1182 = vmatpush1.xpose.msra.mxu0 0.0
        %1183 = vmatprep.subr.mxu0 0.0
        %1184 = vmatpush1.xpose.msra.mxu0 0.0
        %1185 = vmatprep.subr.mxu0 0.0
        %1186 = vmatpush1.xpose.msra.mxu0 0.0
        %1187 = vmatprep.subr.mxu0 0.0
        %1188 = vmatpush1.xpose.msra.mxu0 0.0
        %1189 = vmatprep.subr.mxu0 0.0
        %1190 = vmatpush1.xpose.msra.mxu0 0.0
        %1191 = vmatprep.subr.mxu0 0.0
        %1192 = vmatpush1.xpose.msra.mxu0 0.0
        %1193 = vmatprep.subr.mxu0 0.0
        %1194 = vmatpush1.xpose.msra.mxu0 0.0
        %1195 = vmatprep.subr.mxu0 0.0
        %1196 = vmatpush1.xpose.msra.mxu0 0.0
        %1197 = vmatprep.subr.mxu0 0.0
        %1198 = vmatpush1.xpose.msra.mxu0 0.0
        %1199 = vmatprep.subr.mxu0 0.0
        %1200 = vmatpush1.xpose.msra.mxu0 0.0
        %1201 = vmatprep.mubr.f32.mxu0 0.0
        %1202 = vmatmul.mubr.f32.gmra.mrb[0].mxu0 %v1128
        %v1203 = vpop.f32.mrb[0].mxu0
        %v1204 = vadd.f32 %v691, %v1203
        %v1205 = vpop.f32.mrb[0].mxu0
        %1206 = vmatprep.mubr.f32.mxu0 0.0
        %1207 = vmatmul.mubr.f32.gmra.mrb[0].mxu0 %v1131
        %v1208 = vpop.f32.mrb[0].mxu0
        %v1209 = vadd.f32 %v692, %v1208
        %v1210 = vpop.f32.mrb[0].mxu0
        %1211 = vdwg.mxu0
        %vm1212 = vcmask 130048
        %v1213 = vsel %vm1212, %v1204, -inf
        %1214 = vmax.xlane.f32.xlu0 %v1213
        %v1215 = vpop.xlane.xlu0 %1214
        %v1216 = vsel %vm1212, %v1209, -inf
        %1217 = vmax.xlane.f32.xlu0 %v1216
        %v1218 = vpop.xlane.xlu0 %1217
        %v1219 = vsub.f32 %v1204, %v1215
        %v1220 = vsub.f32 %v1209, %v1218
        %v1221 = vmul.f32 %v1219, 1.442695
        %v1222 = vpow.pop %v1221
        %v1223 = vmul.f32 %v1220, 1.442695
        %v1224 = vpow.pop %v1223
        %v1225 = vsel %vm1212, %v1222, 0.0
        %1226 = vadd.xlane.f32.xlu0 %v1225
        %v1227 = vpop.xlane.xlu0 %1226
        %v1228 = vsel %vm1212, %v1224, 0.0
        %1229 = vadd.xlane.f32.xlu0 %v1228
        %v1230 = vpop.xlane.xlu0 %1229
        %v1231 = vrcp.pop %v1227
        %v1232 = vrcp.pop %v1230
        %v1233 = vmul.f32 %v1222, %v1231
        %v1234 = vmul.f32 %v1224, %v1232
        %v1235 = vmul.f32 %v918, %v1118
        %v1236 = vmul.f32 %v922, %v1118
        %vm1237 = vcmp.eq.s32.totalorder %v712, 1
        %v1238 = vsel %vm1237, 1, 0
        %v1239 = vcvt.s32.f32 %v1238
        %v1240 = vmul.f32 %v1009, %v1239
        %v1241 = vmul.f32 %v1010, %v1239
        %v1243 = vsel %vm807, %v1240, 0
        %v1246 = vsel %vm807, %v1241, 0
        %1248 = vmatprep.subr.mxu0 0.0
        %1249 = vmatpush1.xpose.msra.mxu0 %v1133
        %1250 = vmatprep.subr.mxu0 0.0
        %1251 = vmatpush1.xpose.msra.mxu0 %v1135
        %1252 = vmatprep.subr.mxu0 0.0
        %1253 = vmatpush1.xpose.msra.mxu0 0.0
        %1254 = vmatprep.subr.mxu0 0.0
        %1255 = vmatpush1.xpose.msra.mxu0 0.0
        %1256 = vmatprep.subr.mxu0 0.0
        %1257 = vmatpush1.xpose.msra.mxu0 0.0
        %1258 = vmatprep.subr.mxu0 0.0
        %1259 = vmatpush1.xpose.msra.mxu0 0.0
        %1260 = vmatprep.subr.mxu0 0.0
        %1261 = vmatpush1.xpose.msra.mxu0 0.0
        %1262 = vmatprep.subr.mxu0 0.0
        %1263 = vmatpush1.xpose.msra.mxu0 0.0
        %1264 = vmatprep.subr.mxu0 0.0
        %1265 = vmatpush1.xpose.msra.mxu0 0.0
        %1266 = vmatprep.subr.mxu0 0.0
        %1267 = vmatpush1.xpose.msra.mxu0 0.0
        %1268 = vmatprep.subr.mxu0 0.0
        %1269 = vmatpush1.xpose.msra.mxu0 0.0
        %1270 = vmatprep.subr.mxu0 0.0
        %1271 = vmatpush1.xpose.msra.mxu0 0.0
        %1272 = vmatprep.subr.mxu0 0.0
        %1273 = vmatpush1.xpose.msra.mxu0 0.0
        %1274 = vmatprep.subr.mxu0 0.0
        %1275 = vmatpush1.xpose.msra.mxu0 0.0
        %1276 = vmatprep.subr.mxu0 0.0
        %1277 = vmatpush1.xpose.msra.mxu0 0.0
        %1278 = vmatprep.subr.mxu0 0.0
        %1279 = vmatpush1.xpose.msra.mxu0 0.0
        %1280 = vmatprep.subr.mxu0 0.0
        %1281 = vmatpush1.xpose.msra.mxu0 0.0
        %1282 = vmatprep.subr.mxu0 0.0
        %1283 = vmatpush1.xpose.msra.mxu0 0.0
        %1284 = vmatprep.subr.mxu0 0.0
        %1285 = vmatpush1.xpose.msra.mxu0 0.0
        %1286 = vmatprep.subr.mxu0 0.0
        %1287 = vmatpush1.xpose.msra.mxu0 0.0
        %1288 = vmatprep.subr.mxu0 0.0
        %1289 = vmatpush1.xpose.msra.mxu0 0.0
        %1290 = vmatprep.subr.mxu0 0.0
        %1291 = vmatpush1.xpose.msra.mxu0 0.0
        %1292 = vmatprep.subr.mxu0 0.0
        %1293 = vmatpush1.xpose.msra.mxu0 0.0
        %1294 = vmatprep.subr.mxu0 0.0
        %1295 = vmatpush1.xpose.msra.mxu0 0.0
        %1296 = vmatprep.subr.mxu0 0.0
        %1297 = vmatpush1.xpose.msra.mxu0 0.0
        %1298 = vmatprep.subr.mxu0 0.0
        %1299 = vmatpush1.xpose.msra.mxu0 0.0
        %1300 = vmatprep.subr.mxu0 0.0
        %1301 = vmatpush1.xpose.msra.mxu0 0.0
        %1302 = vmatprep.subr.mxu0 0.0
        %1303 = vmatpush1.xpose.msra.mxu0 0.0
        %1304 = vmatprep.subr.mxu0 0.0
        %1305 = vmatpush1.xpose.msra.mxu0 0.0
        %1306 = vmatprep.subr.mxu0 0.0
        %1307 = vmatpush1.xpose.msra.mxu0 0.0
        %1308 = vmatprep.subr.mxu0 0.0
        %1309 = vmatpush1.xpose.msra.mxu0 0.0
        %1310 = vmatprep.subr.mxu0 0.0
        %1311 = vmatpush1.xpose.msra.mxu0 0.0
        %1312 = vmatprep.mubr.f32.mxu0 0.0
        %1313 = vmatmul.mubr.f32.gmra.mrb[0].mxu0 %v1243
        %v1314 = vpop.f32.mrb[0].mxu0
        %v1315 = vadd.f32 %v691, %v1314
        %v1316 = vpop.f32.mrb[0].mxu0
        %1317 = vmatprep.mubr.f32.mxu0 0.0
        %1318 = vmatmul.mubr.f32.gmra.mrb[0].mxu0 %v1246
        %v1319 = vpop.f32.mrb[0].mxu0
        %v1320 = vadd.f32 %v692, %v1319
        %v1321 = vpop.f32.mrb[0].mxu0
        %1322 = vdwg.mxu0
        %v1323 = vsel %vm1212, %v1315, -inf
        %1324 = vmax.xlane.f32.xlu0 %v1323
        %v1325 = vpop.xlane.xlu0 %1324
        %v1326 = vsel %vm1212, %v1320, -inf
        %1327 = vmax.xlane.f32.xlu0 %v1326
        %v1328 = vpop.xlane.xlu0 %1327
        %v1329 = vsub.f32 %v1315, %v1325
        %v1330 = vsub.f32 %v1320, %v1328
        %v1331 = vmul.f32 %v1329, 1.442695
        %v1332 = vpow.pop %v1331
        %v1333 = vmul.f32 %v1330, 1.442695
        %v1334 = vpow.pop %v1333
        %v1335 = vsel %vm1212, %v1332, 0.0
        %1336 = vadd.xlane.f32.xlu0 %v1335
        %v1337 = vpop.xlane.xlu0 %1336
        %v1338 = vsel %vm1212, %v1334, 0.0
        %1339 = vadd.xlane.f32.xlu0 %v1338
        %v1340 = vpop.xlane.xlu0 %1339
        %v1341 = vrcp.pop %v1337
        %v1342 = vrcp.pop %v1340
        %v1343 = vmul.f32 %v1332, %v1341
        %v1344 = vmul.f32 %v1334, %v1342
        %v1345 = vmul.f32 %v918, %v1239
        %v1346 = vmul.f32 %v922, %v1239
        %v1348 = vsel %vm1212, %v1343, 0
        %v1351 = vsel %vm1212, %v1344, 0
        %1353 = vmatprep.subr.mxu0 0.0
        %1354 = vmatpush1.msra.mxu0 %v1345
        %1355 = vmatprep.subr.mxu0 0.0
        %1356 = vmatpush1.msra.mxu0 %v1346
        %1357 = vmatprep.subr.mxu0 0.0
        %1358 = vmatpush1.msra.mxu0 0.0
        %1359 = vmatprep.subr.mxu0 0.0
        %1360 = vmatpush1.msra.mxu0 0.0
        %1361 = vmatprep.subr.mxu0 0.0
        %1362 = vmatpush1.msra.mxu0 0.0
        %1363 = vmatprep.subr.mxu0 0.0
        %1364 = vmatpush1.msra.mxu0 0.0
        %1365 = vmatprep.subr.mxu0 0.0
        %1366 = vmatpush1.msra.mxu0 0.0
        %1367 = vmatprep.subr.mxu0 0.0
        %1368 = vmatpush1.msra.mxu0 0.0
        %1369 = vmatprep.subr.mxu0 0.0
        %1370 = vmatpush1.msra.mxu0 0.0
        %1371 = vmatprep.subr.mxu0 0.0
        %1372 = vmatpush1.msra.mxu0 0.0
        %1373 = vmatprep.subr.mxu0 0.0
        %1374 = vmatpush1.msra.mxu0 0.0
        %1375 = vmatprep.subr.mxu0 0.0
        %1376 = vmatpush1.msra.mxu0 0.0
        %1377 = vmatprep.subr.mxu0 0.0
        %1378 = vmatpush1.msra.mxu0 0.0
        %1379 = vmatprep.subr.mxu0 0.0
        %1380 = vmatpush1.msra.mxu0 0.0
        %1381 = vmatprep.subr.mxu0 0.0
        %1382 = vmatpush1.msra.mxu0 0.0
        %1383 = vmatprep.subr.mxu0 0.0
        %1384 = vmatpush1.msra.mxu0 0.0
        %1385 = vmatprep.subr.mxu0 0.0
        %1386 = vmatpush1.msra.mxu0 0.0
        %1387 = vmatprep.subr.mxu0 0.0
        %1388 = vmatpush1.msra.mxu0 0.0
        %1389 = vmatprep.subr.mxu0 0.0
        %1390 = vmatpush1.msra.mxu0 0.0
        %1391 = vmatprep.subr.mxu0 0.0
        %1392 = vmatpush1.msra.mxu0 0.0
        %1393 = vmatprep.subr.mxu0 0.0
        %1394 = vmatpush1.msra.mxu0 0.0
        %1395 = vmatprep.subr.mxu0 0.0
        %1396 = vmatpush1.msra.mxu0 0.0
        %1397 = vmatprep.subr.mxu0 0.0
        %1398 = vmatpush1.msra.mxu0 0.0
        %1399 = vmatprep.subr.mxu0 0.0
        %1400 = vmatpush1.msra.mxu0 0.0
        %1401 = vmatprep.subr.mxu0 0.0
        %1402 = vmatpush1.msra.mxu0 0.0
        %1403 = vmatprep.subr.mxu0 0.0
        %1404 = vmatpush1.msra.mxu0 0.0
        %1405 = vmatprep.subr.mxu0 0.0
        %1406 = vmatpush1.msra.mxu0 0.0
        %1407 = vmatprep.subr.mxu0 0.0
        %1408 = vmatpush1.msra.mxu0 0.0
        %1409 = vmatprep.subr.mxu0 0.0
        %1410 = vmatpush1.msra.mxu0 0.0
        %1411 = vmatprep.subr.mxu0 0.0
        %1412 = vmatpush1.msra.mxu0 0.0
        %1413 = vmatprep.subr.mxu0 0.0
        %1414 = vmatpush1.msra.mxu0 0.0
        %1415 = vmatprep.subr.mxu0 0.0
        %1416 = vmatpush1.msra.mxu0 0.0
        %1417 = vmatprep.mubr.f32.mxu0 0.0
        %1418 = vmatmul.mubr.f32.gmra.mrb[0].mxu0 %v1348
        %v1419 = vpop.f32.mrb[0].mxu0
        %v1420 = vadd.f32 0.0, %v1419
        %v1421 = vpop.f32.mrb[0].mxu0
        %1422 = vmatprep.mubr.f32.mxu0 0.0
        %1423 = vmatmul.mubr.f32.gmra.mrb[0].mxu0 %v1351
        %v1424 = vpop.f32.mrb[0].mxu0
        %v1425 = vadd.f32 0.0, %v1424
        %v1426 = vpop.f32.mrb[0].mxu0
        %1427 = vdwg.mxu0
        %v1429 = vsel %vm1212, %v1233, 0
        %v1432 = vsel %vm1212, %v1234, 0
        %1434 = vmatprep.subr.mxu0 0.0
        %1435 = vmatpush1.msra.mxu0 %v1235
        %1436 = vmatprep.subr.mxu0 0.0
        %1437 = vmatpush1.msra.mxu0 %v1236
        %1438 = vmatprep.subr.mxu0 0.0
        %1439 = vmatpush1.msra.mxu0 0.0
        %1440 = vmatprep.subr.mxu0 0.0
        %1441 = vmatpush1.msra.mxu0 0.0
        %1442 = vmatprep.subr.mxu0 0.0
        %1443 = vmatpush1.msra.mxu0 0.0
        %1444 = vmatprep.subr.mxu0 0.0
        %1445 = vmatpush1.msra.mxu0 0.0
        %1446 = vmatprep.subr.mxu0 0.0
        %1447 = vmatpush1.msra.mxu0 0.0
        %1448 = vmatprep.subr.mxu0 0.0
        %1449 = vmatpush1.msra.mxu0 0.0
        %1450 = vmatprep.subr.mxu0 0.0
        %1451 = vmatpush1.msra.mxu0 0.0
        %1452 = vmatprep.subr.mxu0 0.0
        %1453 = vmatpush1.msra.mxu0 0.0
        %1454 = vmatprep.subr.mxu0 0.0
        %1455 = vmatpush1.msra.mxu0 0.0
        %1456 = vmatprep.subr.mxu0 0.0
        %1457 = vmatpush1.msra.mxu0 0.0
        %1458 = vmatprep.subr.mxu0 0.0
        %1459 = vmatpush1.msra.mxu0 0.0
        %1460 = vmatprep.subr.mxu0 0.0
        %1461 = vmatpush1.msra.mxu0 0.0
        %1462 = vmatprep.subr.mxu0 0.0
        %1463 = vmatpush1.msra.mxu0 0.0
        %1464 = vmatprep.subr.mxu0 0.0
        %1465 = vmatpush1.msra.mxu0 0.0
        %1466 = vmatprep.subr.mxu0 0.0
        %1467 = vmatpush1.msra.mxu0 0.0
        %1468 = vmatprep.subr.mxu0 0.0
        %1469 = vmatpush1.msra.mxu0 0.0
        %1470 = vmatprep.subr.mxu0 0.0
        %1471 = vmatpush1.msra.mxu0 0.0
        %1472 = vmatprep.subr.mxu0 0.0
        %1473 = vmatpush1.msra.mxu0 0.0
        %1474 = vmatprep.subr.mxu0 0.0
        %1475 = vmatpush1.msra.mxu0 0.0
        %1476 = vmatprep.subr.mxu0 0.0
        %1477 = vmatpush1.msra.mxu0 0.0
        %1478 = vmatprep.subr.mxu0 0.0
        %1479 = vmatpush1.msra.mxu0 0.0
        %1480 = vmatprep.subr.mxu0 0.0
        %1481 = vmatpush1.msra.mxu0 0.0
        %1482 = vmatprep.subr.mxu0 0.0
        %1483 = vmatpush1.msra.mxu0 0.0
        %1484 = vmatprep.subr.mxu0 0.0
        %1485 = vmatpush1.msra.mxu0 0.0
        %1486 = vmatprep.subr.mxu0 0.0
        %1487 = vmatpush1.msra.mxu0 0.0
        %1488 = vmatprep.subr.mxu0 0.0
        %1489 = vmatpush1.msra.mxu0 0.0
        %1490 = vmatprep.subr.mxu0 0.0
        %1491 = vmatpush1.msra.mxu0 0.0
        %1492 = vmatprep.subr.mxu0 0.0
        %1493 = vmatpush1.msra.mxu0 0.0
        %1494 = vmatprep.subr.mxu0 0.0
        %1495 = vmatpush1.msra.mxu0 0.0
        %1496 = vmatprep.subr.mxu0 0.0
        %1497 = vmatpush1.msra.mxu0 0.0
        %1498 = vmatprep.mubr.f32.mxu0 0.0
        %1499 = vmatmul.mubr.f32.gmra.mrb[0].mxu0 %v1429
        %v1500 = vpop.f32.mrb[0].mxu0
        %v1501 = vadd.f32 %v1420, %v1500
        %v1502 = vpop.f32.mrb[0].mxu0
        %1503 = vmatprep.mubr.f32.mxu0 0.0
        %1504 = vmatmul.mubr.f32.gmra.mrb[0].mxu0 %v1432
        %v1505 = vpop.f32.mrb[0].mxu0
        %v1506 = vadd.f32 %v1425, %v1505
        %v1507 = vpop.f32.mrb[0].mxu0
        %1508 = vdwg.mxu0
        %vm1509 = vcmp.eq.s32.totalorder %v712, 2
        %v1510 = vsel %vm1509, 1, 0
        %v1511 = vcvt.s32.f32 %v1510
        %v1512 = vmul.f32 %v1009, %v1511
        %v1513 = vmul.f32 %v1010, %v1511
        %v1515 = vsel %vm807, %v1512, 0
        %v1518 = vsel %vm807, %v1513, 0
        %1520 = vmatprep.subr.mxu0 0.0
        %1521 = vmatpush1.xpose.msra.mxu0 %v1133
        %1522 = vmatprep.subr.mxu0 0.0
        %1523 = vmatpush1.xpose.msra.mxu0 %v1135
        %1524 = vmatprep.subr.mxu0 0.0
        %1525 = vmatpush1.xpose.msra.mxu0 0.0
        %1526 = vmatprep.subr.mxu0 0.0
        %1527 = vmatpush1.xpose.msra.mxu0 0.0
        %1528 = vmatprep.subr.mxu0 0.0
        %1529 = vmatpush1.xpose.msra.mxu0 0.0
        %1530 = vmatprep.subr.mxu0 0.0
        %1531 = vmatpush1.xpose.msra.mxu0 0.0
        %1532 = vmatprep.subr.mxu0 0.0
        %1533 = vmatpush1.xpose.msra.mxu0 0.0
        %1534 = vmatprep.subr.mxu0 0.0
        %1535 = vmatpush1.xpose.msra.mxu0 0.0
        %1536 = vmatprep.subr.mxu0 0.0
        %1537 = vmatpush1.xpose.msra.mxu0 0.0
        %1538 = vmatprep.subr.mxu0 0.0
        %1539 = vmatpush1.xpose.msra.mxu0 0.0
        %1540 = vmatprep.subr.mxu0 0.0
        %1541 = vmatpush1.xpose.msra.mxu0 0.0
        %1542 = vmatprep.subr.mxu0 0.0
        %1543 = vmatpush1.xpose.msra.mxu0 0.0
        %1544 = vmatprep.subr.mxu0 0.0
        %1545 = vmatpush1.xpose.msra.mxu0 0.0
        %1546 = vmatprep.subr.mxu0 0.0
        %1547 = vmatpush1.xpose.msra.mxu0 0.0
        %1548 = vmatprep.subr.mxu0 0.0
        %1549 = vmatpush1.xpose.msra.mxu0 0.0
        %1550 = vmatprep.subr.mxu0 0.0
        %1551 = vmatpush1.xpose.msra.mxu0 0.0
        %1552 = vmatprep.subr.mxu0 0.0
        %1553 = vmatpush1.xpose.msra.mxu0 0.0
        %1554 = vmatprep.subr.mxu0 0.0
        %1555 = vmatpush1.xpose.msra.mxu0 0.0
        %1556 = vmatprep.subr.mxu0 0.0
        %1557 = vmatpush1.xpose.msra.mxu0 0.0
        %1558 = vmatprep.subr.mxu0 0.0
        %1559 = vmatpush1.xpose.msra.mxu0 0.0
        %1560 = vmatprep.subr.mxu0 0.0
        %1561 = vmatpush1.xpose.msra.mxu0 0.0
        %1562 = vmatprep.subr.mxu0 0.0
        %1563 = vmatpush1.xpose.msra.mxu0 0.0
        %1564 = vmatprep.subr.mxu0 0.0
        %1565 = vmatpush1.xpose.msra.mxu0 0.0
        %1566 = vmatprep.subr.mxu0 0.0
        %1567 = vmatpush1.xpose.msra.mxu0 0.0
        %1568 = vmatprep.subr.mxu0 0.0
        %1569 = vmatpush1.xpose.msra.mxu0 0.0
        %1570 = vmatprep.subr.mxu0 0.0
        %1571 = vmatpush1.xpose.msra.mxu0 0.0
        %1572 = vmatprep.subr.mxu0 0.0
        %1573 = vmatpush1.xpose.msra.mxu0 0.0
        %1574 = vmatprep.subr.mxu0 0.0
        %1575 = vmatpush1.xpose.msra.mxu0 0.0
        %1576 = vmatprep.subr.mxu0 0.0
        %1577 = vmatpush1.xpose.msra.mxu0 0.0
        %1578 = vmatprep.subr.mxu0 0.0
        %1579 = vmatpush1.xpose.msra.mxu0 0.0
        %1580 = vmatprep.subr.mxu0 0.0
        %1581 = vmatpush1.xpose.msra.mxu0 0.0
        %1582 = vmatprep.subr.mxu0 0.0
        %1583 = vmatpush1.xpose.msra.mxu0 0.0
        %1584 = vmatprep.mubr.f32.mxu0 0.0
        %1585 = vmatmul.mubr.f32.gmra.mrb[0].mxu0 %v1515
        %v1586 = vpop.f32.mrb[0].mxu0
        %v1587 = vadd.f32 %v691, %v1586
        %v1588 = vpop.f32.mrb[0].mxu0
        %1589 = vmatprep.mubr.f32.mxu0 0.0
        %1590 = vmatmul.mubr.f32.gmra.mrb[0].mxu0 %v1518
        %v1591 = vpop.f32.mrb[0].mxu0
        %v1592 = vadd.f32 %v692, %v1591
        %v1593 = vpop.f32.mrb[0].mxu0
        %1594 = vdwg.mxu0
        %v1595 = vsel %vm1212, %v1587, -inf
        %1596 = vmax.xlane.f32.xlu0 %v1595
        %v1597 = vpop.xlane.xlu0 %1596
        %v1598 = vsel %vm1212, %v1592, -inf
        %1599 = vmax.xlane.f32.xlu0 %v1598
        %v1600 = vpop.xlane.xlu0 %1599
        %v1601 = vsub.f32 %v1587, %v1597
        %v1602 = vsub.f32 %v1592, %v1600
        %v1603 = vmul.f32 %v1601, 1.442695
        %v1604 = vpow.pop %v1603
        %v1605 = vmul.f32 %v1602, 1.442695
        %v1606 = vpow.pop %v1605
        %v1607 = vsel %vm1212, %v1604, 0.0
        %1608 = vadd.xlane.f32.xlu0 %v1607
        %v1609 = vpop.xlane.xlu0 %1608
        %v1610 = vsel %vm1212, %v1606, 0.0
        %1611 = vadd.xlane.f32.xlu0 %v1610
        %v1612 = vpop.xlane.xlu0 %1611
        %v1613 = vrcp.pop %v1609
        %v1614 = vrcp.pop %v1612
        %v1615 = vmul.f32 %v1604, %v1613
        %v1616 = vmul.f32 %v1606, %v1614
        %v1617 = vmul.f32 %v918, %v1511
        %v1618 = vmul.f32 %v922, %v1511
        %v1620 = vsel %vm1212, %v1615, 0
        %v1623 = vsel %vm1212, %v1616, 0
        %1625 = vmatprep.subr.mxu0 0.0
        %1626 = vmatpush1.msra.mxu0 %v1617
        %1627 = vmatprep.subr.mxu0 0.0
        %1628 = vmatpush1.msra.mxu0 %v1618
        %1629 = vmatprep.subr.mxu0 0.0
        %1630 = vmatpush1.msra.mxu0 0.0
        %1631 = vmatprep.subr.mxu0 0.0
        %1632 = vmatpush1.msra.mxu0 0.0
        %1633 = vmatprep.subr.mxu0 0.0
        %1634 = vmatpush1.msra.mxu0 0.0
        %1635 = vmatprep.subr.mxu0 0.0
        %1636 = vmatpush1.msra.mxu0 0.0
        %1637 = vmatprep.subr.mxu0 0.0
        %1638 = vmatpush1.msra.mxu0 0.0
        %1639 = vmatprep.subr.mxu0 0.0
        %1640 = vmatpush1.msra.mxu0 0.0
        %1641 = vmatprep.subr.mxu0 0.0
        %1642 = vmatpush1.msra.mxu0 0.0
        %1643 = vmatprep.subr.mxu0 0.0
        %1644 = vmatpush1.msra.mxu0 0.0
        %1645 = vmatprep.subr.mxu0 0.0
        %1646 = vmatpush1.msra.mxu0 0.0
        %1647 = vmatprep.subr.mxu0 0.0
        %1648 = vmatpush1.msra.mxu0 0.0
        %1649 = vmatprep.subr.mxu0 0.0
        %1650 = vmatpush1.msra.mxu0 0.0
        %1651 = vmatprep.subr.mxu0 0.0
        %1652 = vmatpush1.msra.mxu0 0.0
        %1653 = vmatprep.subr.mxu0 0.0
        %1654 = vmatpush1.msra.mxu0 0.0
        %1655 = vmatprep.subr.mxu0 0.0
        %1656 = vmatpush1.msra.mxu0 0.0
        %1657 = vmatprep.subr.mxu0 0.0
        %1658 = vmatpush1.msra.mxu0 0.0
        %1659 = vmatprep.subr.mxu0 0.0
        %1660 = vmatpush1.msra.mxu0 0.0
        %1661 = vmatprep.subr.mxu0 0.0
        %1662 = vmatpush1.msra.mxu0 0.0
        %1663 = vmatprep.subr.mxu0 0.0
        %1664 = vmatpush1.msra.mxu0 0.0
        %1665 = vmatprep.subr.mxu0 0.0
        %1666 = vmatpush1.msra.mxu0 0.0
        %1667 = vmatprep.subr.mxu0 0.0
        %1668 = vmatpush1.msra.mxu0 0.0
        %1669 = vmatprep.subr.mxu0 0.0
        %1670 = vmatpush1.msra.mxu0 0.0
        %1671 = vmatprep.subr.mxu0 0.0
        %1672 = vmatpush1.msra.mxu0 0.0
        %1673 = vmatprep.subr.mxu0 0.0
        %1674 = vmatpush1.msra.mxu0 0.0
        %1675 = vmatprep.subr.mxu0 0.0
        %1676 = vmatpush1.msra.mxu0 0.0
        %1677 = vmatprep.subr.mxu0 0.0
        %1678 = vmatpush1.msra.mxu0 0.0
        %1679 = vmatprep.subr.mxu0 0.0
        %1680 = vmatpush1.msra.mxu0 0.0
        %1681 = vmatprep.subr.mxu0 0.0
        %1682 = vmatpush1.msra.mxu0 0.0
        %1683 = vmatprep.subr.mxu0 0.0
        %1684 = vmatpush1.msra.mxu0 0.0
        %1685 = vmatprep.subr.mxu0 0.0
        %1686 = vmatpush1.msra.mxu0 0.0
        %1687 = vmatprep.subr.mxu0 0.0
        %1688 = vmatpush1.msra.mxu0 0.0
        %1689 = vmatprep.mubr.f32.mxu0 0.0
        %1690 = vmatmul.mubr.f32.gmra.mrb[0].mxu0 %v1620
        %v1691 = vpop.f32.mrb[0].mxu0
        %v1692 = vadd.f32 0.0, %v1691
        %v1693 = vpop.f32.mrb[0].mxu0
        %1694 = vmatprep.mubr.f32.mxu0 0.0
        %1695 = vmatmul.mubr.f32.gmra.mrb[0].mxu0 %v1623
        %v1696 = vpop.f32.mrb[0].mxu0
        %v1697 = vadd.f32 0.0, %v1696
        %v1698 = vpop.f32.mrb[0].mxu0
        %1699 = vdwg.mxu0
        %v1700 = vadd.f32 %v1501, %v1692
        %v1701 = vadd.f32 %v1506, %v1697
        %vm1702 = vcmp.eq.s32.totalorder %v712, 3
        %v1703 = vsel %vm1702, 1, 0
        %v1704 = vcvt.s32.f32 %v1703
        %v1705 = vmul.f32 %v1009, %v1704
        %v1706 = vmul.f32 %v1010, %v1704
        %v1708 = vsel %vm807, %v1705, 0
        %v1711 = vsel %vm807, %v1706, 0
        %1713 = vmatprep.subr.mxu0 0.0
        %1714 = vmatpush1.xpose.msra.mxu0 %v1133
        %1715 = vmatprep.subr.mxu0 0.0
        %1716 = vmatpush1.xpose.msra.mxu0 %v1135
        %1717 = vmatprep.subr.mxu0 0.0
        %1718 = vmatpush1.xpose.msra.mxu0 0.0
        %1719 = vmatprep.subr.mxu0 0.0
        %1720 = vmatpush1.xpose.msra.mxu0 0.0
        %1721 = vmatprep.subr.mxu0 0.0
        %1722 = vmatpush1.xpose.msra.mxu0 0.0
        %1723 = vmatprep.subr.mxu0 0.0
        %1724 = vmatpush1.xpose.msra.mxu0 0.0
        %1725 = vmatprep.subr.mxu0 0.0
        %1726 = vmatpush1.xpose.msra.mxu0 0.0
        %1727 = vmatprep.subr.mxu0 0.0
        %1728 = vmatpush1.xpose.msra.mxu0 0.0
        %1729 = vmatprep.subr.mxu0 0.0
        %1730 = vmatpush1.xpose.msra.mxu0 0.0
        %1731 = vmatprep.subr.mxu0 0.0
        %1732 = vmatpush1.xpose.msra.mxu0 0.0
        %1733 = vmatprep.subr.mxu0 0.0
        %1734 = vmatpush1.xpose.msra.mxu0 0.0
        %1735 = vmatprep.subr.mxu0 0.0
        %1736 = vmatpush1.xpose.msra.mxu0 0.0
        %1737 = vmatprep.subr.mxu0 0.0
        %1738 = vmatpush1.xpose.msra.mxu0 0.0
        %1739 = vmatprep.subr.mxu0 0.0
        %1740 = vmatpush1.xpose.msra.mxu0 0.0
        %1741 = vmatprep.subr.mxu0 0.0
        %1742 = vmatpush1.xpose.msra.mxu0 0.0
        %1743 = vmatprep.subr.mxu0 0.0
        %1744 = vmatpush1.xpose.msra.mxu0 0.0
        %1745 = vmatprep.subr.mxu0 0.0
        %1746 = vmatpush1.xpose.msra.mxu0 0.0
        %1747 = vmatprep.subr.mxu0 0.0
        %1748 = vmatpush1.xpose.msra.mxu0 0.0
        %1749 = vmatprep.subr.mxu0 0.0
        %1750 = vmatpush1.xpose.msra.mxu0 0.0
        %1751 = vmatprep.subr.mxu0 0.0
        %1752 = vmatpush1.xpose.msra.mxu0 0.0
        %1753 = vmatprep.subr.mxu0 0.0
        %1754 = vmatpush1.xpose.msra.mxu0 0.0
        %1755 = vmatprep.subr.mxu0 0.0
        %1756 = vmatpush1.xpose.msra.mxu0 0.0
        %1757 = vmatprep.subr.mxu0 0.0
        %1758 = vmatpush1.xpose.msra.mxu0 0.0
        %1759 = vmatprep.subr.mxu0 0.0
        %1760 = vmatpush1.xpose.msra.mxu0 0.0
        %1761 = vmatprep.subr.mxu0 0.0
        %1762 = vmatpush1.xpose.msra.mxu0 0.0
        %1763 = vmatprep.subr.mxu0 0.0
        %1764 = vmatpush1.xpose.msra.mxu0 0.0
        %1765 = vmatprep.subr.mxu0 0.0
        %1766 = vmatpush1.xpose.msra.mxu0 0.0
        %1767 = vmatprep.subr.mxu0 0.0
        %1768 = vmatpush1.xpose.msra.mxu0 0.0
        %1769 = vmatprep.subr.mxu0 0.0
        %1770 = vmatpush1.xpose.msra.mxu0 0.0
        %1771 = vmatprep.subr.mxu0 0.0
        %1772 = vmatpush1.xpose.msra.mxu0 0.0
        %1773 = vmatprep.subr.mxu0 0.0
        %1774 = vmatpush1.xpose.msra.mxu0 0.0
        %1775 = vmatprep.subr.mxu0 0.0
        %1776 = vmatpush1.xpose.msra.mxu0 0.0
        %1777 = vmatprep.mubr.f32.mxu0 0.0
        %1778 = vmatmul.mubr.f32.gmra.mrb[0].mxu0 %v1708
        %v1779 = vpop.f32.mrb[0].mxu0
        %v1780 = vadd.f32 %v691, %v1779
        %v1781 = vpop.f32.mrb[0].mxu0
        %1782 = vmatprep.mubr.f32.mxu0 0.0
        %1783 = vmatmul.mubr.f32.gmra.mrb[0].mxu0 %v1711
        %v1784 = vpop.f32.mrb[0].mxu0
        %v1785 = vadd.f32 %v692, %v1784
        %v1786 = vpop.f32.mrb[0].mxu0
        %1787 = vdwg.mxu0
        %v1788 = vsel %vm1212, %v1780, -inf
        %1789 = vmax.xlane.f32.xlu0 %v1788
        %v1790 = vpop.xlane.xlu0 %1789
        %v1791 = vsel %vm1212, %v1785, -inf
        %1792 = vmax.xlane.f32.xlu0 %v1791
        %v1793 = vpop.xlane.xlu0 %1792
        %v1794 = vsub.f32 %v1780, %v1790
        %v1795 = vsub.f32 %v1785, %v1793
        %v1796 = vmul.f32 %v1794, 1.442695
        %v1797 = vpow.pop %v1796
        %v1798 = vmul.f32 %v1795, 1.442695
        %v1799 = vpow.pop %v1798
        %v1800 = vsel %vm1212, %v1797, 0.0
        %1801 = vadd.xlane.f32.xlu0 %v1800
        %v1802 = vpop.xlane.xlu0 %1801
        %v1803 = vsel %vm1212, %v1799, 0.0
        %1804 = vadd.xlane.f32.xlu0 %v1803
        %v1805 = vpop.xlane.xlu0 %1804
        %v1806 = vrcp.pop %v1802
        %v1807 = vrcp.pop %v1805
        %v1808 = vmul.f32 %v1797, %v1806
        %v1809 = vmul.f32 %v1799, %v1807
        %v1810 = vmul.f32 %v918, %v1704
        %v1811 = vmul.f32 %v922, %v1704
        %v1813 = vsel %vm1212, %v1808, 0
        %v1816 = vsel %vm1212, %v1809, 0
        %1818 = vmatprep.subr.mxu0 0.0
        %1819 = vmatpush1.msra.mxu0 %v1810
        %1820 = vmatprep.subr.mxu0 0.0
        %1821 = vmatpush1.msra.mxu0 %v1811
        %1822 = vmatprep.subr.mxu0 0.0
        %1823 = vmatpush1.msra.mxu0 0.0
        %1824 = vmatprep.subr.mxu0 0.0
        %1825 = vmatpush1.msra.mxu0 0.0
        %1826 = vmatprep.subr.mxu0 0.0
        %1827 = vmatpush1.msra.mxu0 0.0
        %1828 = vmatprep.subr.mxu0 0.0
        %1829 = vmatpush1.msra.mxu0 0.0
        %1830 = vmatprep.subr.mxu0 0.0
        %1831 = vmatpush1.msra.mxu0 0.0
        %1832 = vmatprep.subr.mxu0 0.0
        %1833 = vmatpush1.msra.mxu0 0.0
        %1834 = vmatprep.subr.mxu0 0.0
        %1835 = vmatpush1.msra.mxu0 0.0
        %1836 = vmatprep.subr.mxu0 0.0
        %1837 = vmatpush1.msra.mxu0 0.0
        %1838 = vmatprep.subr.mxu0 0.0
        %1839 = vmatpush1.msra.mxu0 0.0
        %1840 = vmatprep.subr.mxu0 0.0
        %1841 = vmatpush1.msra.mxu0 0.0
        %1842 = vmatprep.subr.mxu0 0.0
        %1843 = vmatpush1.msra.mxu0 0.0
        %1844 = vmatprep.subr.mxu0 0.0
        %1845 = vmatpush1.msra.mxu0 0.0
        %1846 = vmatprep.subr.mxu0 0.0
        %1847 = vmatpush1.msra.mxu0 0.0
        %1848 = vmatprep.subr.mxu0 0.0
        %1849 = vmatpush1.msra.mxu0 0.0
        %1850 = vmatprep.subr.mxu0 0.0
        %1851 = vmatpush1.msra.mxu0 0.0
        %1852 = vmatprep.subr.mxu0 0.0
        %1853 = vmatpush1.msra.mxu0 0.0
        %1854 = vmatprep.subr.mxu0 0.0
        %1855 = vmatpush1.msra.mxu0 0.0
        %1856 = vmatprep.subr.mxu0 0.0
        %1857 = vmatpush1.msra.mxu0 0.0
        %1858 = vmatprep.subr.mxu0 0.0
        %1859 = vmatpush1.msra.mxu0 0.0
        %1860 = vmatprep.subr.mxu0 0.0
        %1861 = vmatpush1.msra.mxu0 0.0
        %1862 = vmatprep.subr.mxu0 0.0
        %1863 = vmatpush1.msra.mxu0 0.0
        %1864 = vmatprep.subr.mxu0 0.0
        %1865 = vmatpush1.msra.mxu0 0.0
        %1866 = vmatprep.subr.mxu0 0.0
        %1867 = vmatpush1.msra.mxu0 0.0
        %1868 = vmatprep.subr.mxu0 0.0
        %1869 = vmatpush1.msra.mxu0 0.0
        %1870 = vmatprep.subr.mxu0 0.0
        %1871 = vmatpush1.msra.mxu0 0.0
        %1872 = vmatprep.subr.mxu0 0.0
        %1873 = vmatpush1.msra.mxu0 0.0
        %1874 = vmatprep.subr.mxu0 0.0
        %1875 = vmatpush1.msra.mxu0 0.0
        %1876 = vmatprep.subr.mxu0 0.0
        %1877 = vmatpush1.msra.mxu0 0.0
        %1878 = vmatprep.subr.mxu0 0.0
        %1879 = vmatpush1.msra.mxu0 0.0
        %1880 = vmatprep.subr.mxu0 0.0
        %1881 = vmatpush1.msra.mxu0 0.0
        %1882 = vmatprep.mubr.f32.mxu0 0.0
        %1883 = vmatmul.mubr.f32.gmra.mrb[0].mxu0 %v1813
        %v1884 = vpop.f32.mrb[0].mxu0
        %v1885 = vadd.f32 0.0, %v1884
        %v1886 = vpop.f32.mrb[0].mxu0
        %1887 = vmatprep.mubr.f32.mxu0 0.0
        %1888 = vmatmul.mubr.f32.gmra.mrb[0].mxu0 %v1816
        %v1889 = vpop.f32.mrb[0].mxu0
        %v1890 = vadd.f32 0.0, %v1889
        %v1891 = vpop.f32.mrb[0].mxu0
        %1892 = vdwg.mxu0
        %v1893 = vadd.f32 %v1700, %v1885
        %v1894 = vadd.f32 %v1701, %v1890
        %v1895 = vpack.c.bf16 %v1894, %v1893
        %v1896 = vld [vmem:[%s464] sm:$0xf]
        %v1897 = vld [vmem:[%s464 + $0x4] sm:$0xf]
        %v1898 = vld [vmem:[%s464 + $0x8] sm:$0xf]
        %v1899 = vld [vmem:[%s464 + $0xc] sm:$0xf]
        %v1900 = vld [vmem:[%s464 + $0x10] sm:$0xf]
        %v1901 = vld [vmem:[%s464 + $0x14] sm:$0xf]
        %v1902 = vld [vmem:[%s464 + $0x18] sm:$0xf]
        %v1903 = vld [vmem:[%s464 + $0x1c] sm:$0xf]
        %v1912 = vunpack.c.l.b16 %v1896
        %v1913 = vunpack.c.l.b16 %v1897
        %v1914 = vunpack.c.l.b16 %v1898
        %v1915 = vunpack.c.l.b16 %v1899
        %v1916 = vunpack.c.l.b16 %v1900
        %v1917 = vunpack.c.l.b16 %v1901
        %v1918 = vunpack.c.l.b16 %v1902
        %v1919 = vunpack.c.l.b16 %v1903
        %v1920 = vpack.c.b16 %v1913, %v1912
        %v1921 = vpack.c.b16 %v1915, %v1914
        %v1922 = vpack.c.b16 %v1917, %v1916
        %v1923 = vpack.c.b16 %v1919, %v1918
        %v1929 = vsel %vm807, %v1895, 0
        %1931 = vmatprep.subr.bf16.mxu0 0
        %1932 = vmatpush1.bf16.msra.mxu0 %v1920
        %1933 = vmatprep.subr.bf16.mxu0 0
        %1934 = vmatpush1.bf16.msra.mxu0 %v1921
        %1935 = vmatprep.subr.bf16.mxu0 0
        %1936 = vmatpush1.bf16.msra.mxu0 %v1922
        %1937 = vmatprep.subr.bf16.mxu0 0
        %1938 = vmatpush1.bf16.msra.mxu0 %v1923
        %1939 = vmatprep.subr.bf16.mxu0 0
        %1940 = vmatpush1.bf16.msra.mxu0 0
        %1941 = vmatprep.subr.bf16.mxu0 0
        %1942 = vmatpush1.bf16.msra.mxu0 0
        %1943 = vmatprep.subr.bf16.mxu0 0
        %1944 = vmatpush1.bf16.msra.mxu0 0
        %1945 = vmatprep.subr.bf16.mxu0 0
        %1946 = vmatpush1.bf16.msra.mxu0 0
        %1947 = vmatprep.subr.bf16.mxu0 0
        %1948 = vmatpush1.bf16.msra.mxu0 0
        %1949 = vmatprep.subr.bf16.mxu0 0
        %1950 = vmatpush1.bf16.msra.mxu0 0
        %1951 = vmatprep.subr.bf16.mxu0 0
        %1952 = vmatpush1.bf16.msra.mxu0 0
        %1953 = vmatprep.subr.bf16.mxu0 0
        %1954 = vmatpush1.bf16.msra.mxu0 0
        %1955 = vmatprep.subr.bf16.mxu0 0
        %1956 = vmatpush1.bf16.msra.mxu0 0
        %1957 = vmatprep.subr.bf16.mxu0 0
        %1958 = vmatpush1.bf16.msra.mxu0 0
        %1959 = vmatprep.subr.bf16.mxu0 0
        %1960 = vmatpush1.bf16.msra.mxu0 0
        %1961 = vmatprep.subr.bf16.mxu0 0
        %1962 = vmatpush1.bf16.msra.mxu0 0
        %1963 = vmatprep.mubr.bf16.mxu0 0
        %1964 = vmatmul.mubr.bf16.gmra.mrb[0].mxu0 %v1929
        %v1965 = vpop.f32.mrb[0].mxu0
        %v1966 = vadd.f32 0.0, %v1965
        %v1967 = vpop.f32.mrb[0].mxu0
        %v1968 = vpop.f32.mrb[0].mxu0
        %v1969 = vadd.f32 0.0, %v1968
        %v1970 = vpop.f32.mrb[0].mxu0
        %1971 = vdwg.mxu0
        %v1972 = vadd.f32 %v802, %v1966
        %v1973 = vadd.f32 %v803, %v1969
        %v1974 = vld [vmem:[%s454 + $0x1] sm:$0x1]
        %v1975 = vmul.f32 %v1972, %v1972
        %v1976 = vmul.f32 %v1973, %v1973
        %v1977 = vsel %vm807, %v1975, 0.0
        %1978 = vadd.xlane.f32.xlu0 %v1977
        %v1979 = vpop.xlane.xlu0 %1978
        %v1980 = vsel %vm807, %v1976, 0.0
        %1981 = vadd.xlane.f32.xlu0 %v1980
        %v1982 = vpop.xlane.xlu0 %1981
        %v1983 = vmul.f32 %v1979, %v814
        %v1984 = vmul.f32 %v1982, %v814
        %v1985 = vadd.f32 %v1983, 1e-05
        %v1986 = vadd.f32 %v1984, 1e-05
        %v1987 = vrsqrt.pop %v1985
        %v1988 = vrsqrt.pop %v1986
        %v1989 = vmul.f32 %v1972, %v1987
        %v1990 = vmul.f32 %v1973, %v1988
        %v1991 = vlaneseq
        %v1992 = vshrl.u32 %v1991, 7
        %v1993 = vsub.s32 0, %v1992
        %v1994 = vrot.slane %v1974, %v1993
        %v1995 = vmul.f32 %v1989, %v1994
        %v1996 = vmul.f32 %v1990, %v1994
        %v1997 = vpack.c.bf16 %v1996, %v1995
        %v1998 = vld [vmem:[%s469] sm:$0xff]
        %v1999 = vld [vmem:[%s469 + $0x8] sm:$0xf]
        %v2000 = vld [vmem:[%s469 + $0xc] sm:$0xff]
        %v2001 = vld [vmem:[%s469 + $0x14] sm:$0xf]
        %v2002 = vld [vmem:[%s469 + $0x18] sm:$0xff]
        %v2003 = vld [vmem:[%s469 + $0x20] sm:$0xf]
        %v2004 = vld [vmem:[%s469 + $0x24] sm:$0xff]
        %v2005 = vld [vmem:[%s469 + $0x2c] sm:$0xf]
        %v2006 = vld [vmem:[%s469 + $0x30] sm:$0xff]
        %v2007 = vld [vmem:[%s469 + $0x38] sm:$0xf]
        %v2008 = vld [vmem:[%s469 + $0x3c] sm:$0xff]
        %v2009 = vld [vmem:[%s469 + $0x44] sm:$0xf]
        %v2010 = vld [vmem:[%s469 + $0x48] sm:$0xff]
        %v2011 = vld [vmem:[%s469 + $0x50] sm:$0xf]
        %v2012 = vld [vmem:[%s469 + $0x54] sm:$0xff]
        %v2013 = vld [vmem:[%s469 + $0x5c] sm:$0xf]
        %v2030 = vunpack.c.l.b16 %v1998
        %v2031 = vunpack.c.h.b16 %v1998
        %v2032 = vunpack.c.l.b16 %v1999
        %v2033 = vunpack.c.l.b16 %v2000
        %v2034 = vunpack.c.h.b16 %v2000
        %v2035 = vunpack.c.l.b16 %v2001
        %v2036 = vunpack.c.l.b16 %v2002
        %v2037 = vunpack.c.h.b16 %v2002
        %v2038 = vunpack.c.l.b16 %v2003
        %v2039 = vunpack.c.l.b16 %v2004
        %v2040 = vunpack.c.h.b16 %v2004
        %v2041 = vunpack.c.l.b16 %v2005
        %v2042 = vunpack.c.l.b16 %v2006
        %v2043 = vunpack.c.h.b16 %v2006
        %v2044 = vunpack.c.l.b16 %v2007
        %v2045 = vunpack.c.l.b16 %v2008
        %v2046 = vunpack.c.h.b16 %v2008
        %v2047 = vunpack.c.l.b16 %v2009
        %v2048 = vunpack.c.l.b16 %v2010
        %v2049 = vunpack.c.h.b16 %v2010
        %v2050 = vunpack.c.l.b16 %v2011
        %v2051 = vunpack.c.l.b16 %v2012
        %v2052 = vunpack.c.h.b16 %v2012
        %v2053 = vunpack.c.l.b16 %v2013
        %v2054 = vpack.c.b16 %v2033, %v2030
        %v2055 = vpack.c.b16 %v2034, %v2031
        %v2056 = vpack.c.b16 %v2035, %v2032
        %v2057 = vpack.c.b16 %v2039, %v2036
        %v2058 = vpack.c.b16 %v2040, %v2037
        %v2059 = vpack.c.b16 %v2041, %v2038
        %v2060 = vpack.c.b16 %v2045, %v2042
        %v2061 = vpack.c.b16 %v2046, %v2043
        %v2062 = vpack.c.b16 %v2047, %v2044
        %v2063 = vpack.c.b16 %v2051, %v2048
        %v2064 = vpack.c.b16 %v2052, %v2049
        %v2065 = vpack.c.b16 %v2053, %v2050
        %v2079 = vsel %vm807, %v1997, 0
        %2081 = vmatprep.subr.bf16.mxu0 %v2055
        %2082 = vmatpush1.bf16.msra.mxu0 %v2054
        %2083 = vmatprep.subr.bf16.mxu0 %v2058
        %2084 = vmatpush1.bf16.msra.mxu0 %v2057
        %2085 = vmatprep.subr.bf16.mxu0 %v2061
        %2086 = vmatpush1.bf16.msra.mxu0 %v2060
        %2087 = vmatprep.subr.bf16.mxu0 %v2064
        %2088 = vmatpush1.bf16.msra.mxu0 %v2063
        %2089 = vmatprep.subr.bf16.mxu0 0
        %2090 = vmatpush1.bf16.msra.mxu0 0
        %2091 = vmatprep.subr.bf16.mxu0 0
        %2092 = vmatpush1.bf16.msra.mxu0 0
        %2093 = vmatprep.subr.bf16.mxu0 0
        %2094 = vmatpush1.bf16.msra.mxu0 0
        %2095 = vmatprep.subr.bf16.mxu0 0
        %2096 = vmatpush1.bf16.msra.mxu0 0
        %2097 = vmatprep.subr.bf16.mxu0 0
        %2098 = vmatpush1.bf16.msra.mxu0 0
        %2099 = vmatprep.subr.bf16.mxu0 0
        %2100 = vmatpush1.bf16.msra.mxu0 0
        %2101 = vmatprep.subr.bf16.mxu0 0
        %2102 = vmatpush1.bf16.msra.mxu0 0
        %2103 = vmatprep.subr.bf16.mxu0 0
        %2104 = vmatpush1.bf16.msra.mxu0 0
        %2105 = vmatprep.subr.bf16.mxu0 0
        %2106 = vmatpush1.bf16.msra.mxu0 0
        %2107 = vmatprep.subr.bf16.mxu0 0
        %2108 = vmatpush1.bf16.msra.mxu0 0
        %2109 = vmatprep.subr.bf16.mxu0 0
        %2110 = vmatpush1.bf16.msra.mxu0 0
        %2111 = vmatprep.subr.bf16.mxu0 0
        %2112 = vmatpush1.bf16.msra.mxu0 0
        %2113 = vmatprep.mubr.bf16.mxu0 0
        %2114 = vmatmul.mubr.bf16.gmra.mrb[0].mxu0 %v2079
        %v2115 = vpop.f32.mrb[0].mxu0
        %v2116 = vadd.f32 0.0, %v2115
        %v2117 = vpop.f32.mrb[0].mxu0
        %v2118 = vadd.f32 0.0, %v2117
        %v2119 = vpop.f32.mrb[0].mxu0
        %v2120 = vadd.f32 0.0, %v2119
        %v2121 = vpop.f32.mrb[0].mxu0
        %v2122 = vadd.f32 0.0, %v2121
        %2123 = vdwg.mxu0
        %2124 = vmatprep.subr.bf16.mxu0 0
        %2125 = vmatpush1.bf16.msra.mxu0 %v2056
        %2126 = vmatprep.subr.bf16.mxu0 0
        %2127 = vmatpush1.bf16.msra.mxu0 %v2059
        %2128 = vmatprep.subr.bf16.mxu0 0
        %2129 = vmatpush1.bf16.msra.mxu0 %v2062
        %2130 = vmatprep.subr.bf16.mxu0 0
        %2131 = vmatpush1.bf16.msra.mxu0 %v2065
        %2132 = vmatprep.subr.bf16.mxu0 0
        %2133 = vmatpush1.bf16.msra.mxu0 0
        %2134 = vmatprep.subr.bf16.mxu0 0
        %2135 = vmatpush1.bf16.msra.mxu0 0
        %2136 = vmatprep.subr.bf16.mxu0 0
        %2137 = vmatpush1.bf16.msra.mxu0 0
        %2138 = vmatprep.subr.bf16.mxu0 0
        %2139 = vmatpush1.bf16.msra.mxu0 0
        %2140 = vmatprep.subr.bf16.mxu0 0
        %2141 = vmatpush1.bf16.msra.mxu0 0
        %2142 = vmatprep.subr.bf16.mxu0 0
        %2143 = vmatpush1.bf16.msra.mxu0 0
        %2144 = vmatprep.subr.bf16.mxu0 0
        %2145 = vmatpush1.bf16.msra.mxu0 0
        %2146 = vmatprep.subr.bf16.mxu0 0
        %2147 = vmatpush1.bf16.msra.mxu0 0
        %2148 = vmatprep.subr.bf16.mxu0 0
        %2149 = vmatpush1.bf16.msra.mxu0 0
        %2150 = vmatprep.subr.bf16.mxu0 0
        %2151 = vmatpush1.bf16.msra.mxu0 0
        %2152 = vmatprep.subr.bf16.mxu0 0
        %2153 = vmatpush1.bf16.msra.mxu0 0
        %2154 = vmatprep.subr.bf16.mxu0 0
        %2155 = vmatpush1.bf16.msra.mxu0 0
        %2156 = vmatprep.mubr.bf16.mxu0 0
        %2157 = vmatmul.mubr.bf16.gmra.mrb[0].mxu0 %v2079
        %v2158 = vpop.f32.mrb[0].mxu0
        %v2159 = vadd.f32 0.0, %v2158
        %v2160 = vpop.f32.mrb[0].mxu0
        %v2161 = vpop.f32.mrb[0].mxu0
        %v2162 = vadd.f32 0.0, %v2161
        %v2163 = vpop.f32.mrb[0].mxu0
        %2164 = vdwg.mxu0
        %v2165 = vxor.u32 %v2116, 2147483648
        %v2166 = vxor.u32 %v2118, 2147483648
        %v2167 = vxor.u32 %v2120, 2147483648
        %v2168 = vxor.u32 %v2122, 2147483648
        %v2169 = vmul.f32 %v2165, 1.442695
        %v2170 = vpow.pop %v2169
        %v2171 = vmul.f32 %v2166, 1.442695
        %v2172 = vpow.pop %v2171
        %v2173 = vmul.f32 %v2167, 1.442695
        %v2174 = vpow.pop %v2173
        %v2175 = vmul.f32 %v2168, 1.442695
        %v2176 = vpow.pop %v2175
        %v2177 = vadd.f32 %v2170, 1.0
        %v2178 = vadd.f32 %v2172, 1.0
        %v2179 = vadd.f32 %v2174, 1.0
        %v2180 = vadd.f32 %v2176, 1.0
        %v2181 = vrcp.pop %v2177
        %v2182 = vmul.f32 1.0, %v2181
        %v2183 = vrcp.pop %v2178
        %v2184 = vmul.f32 1.0, %v2183
        %v2185 = vrcp.pop %v2179
        %v2186 = vmul.f32 1.0, %v2185
        %v2187 = vrcp.pop %v2180
        %v2188 = vmul.f32 1.0, %v2187
        %v2189 = vmul.f32 %v2116, %v2182
        %v2190 = vmul.f32 %v2118, %v2184
        %v2191 = vmul.f32 %v2120, %v2186
        %v2192 = vmul.f32 %v2122, %v2188
        %2197 = vrot.lane.b32.xlu0 %v2118, 64
        %v2198 = vpop.permute.xlu0 %2197
        %2199 = vrot.lane.b32.xlu0 %v2159, 64
        %v2200 = vpop.permute.xlu0 %2199
        %2201 = vrot.lane.b32.xlu0 %v2122, 64
        %v2202 = vpop.permute.xlu0 %2201
        %2203 = vrot.lane.b32.xlu0 %v2162, 64
        %v2204 = vpop.permute.xlu0 %2203
        %v2205 = vsel %vm807, %v2198, %v2200
        %v2206 = vsel %vm807, %v2202, %v2204
        %v2211 = vmul.f32 %v2189, %v2205
        %v2212 = vmul.f32 %v2190, %v2200
        %v2213 = vmul.f32 %v2191, %v2206
        %v2214 = vmul.f32 %v2192, %v2204
        %v2215 = vpack.c.bf16 %v2213, %v2211
        %v2216 = vpack.c.bf16 %v2214, %v2212
        %v2217 = vld [vmem:[%s474] sm:$0xf]
        %v2218 = vld [vmem:[%s474 + $0x4] sm:$0xf]
        %v2219 = vld [vmem:[%s474 + $0x8] sm:$0xf]
        %v2220 = vld [vmem:[%s474 + $0xc] sm:$0xf]
        %v2221 = vld [vmem:[%s474 + $0x10] sm:$0xf]
        %v2222 = vld [vmem:[%s474 + $0x14] sm:$0xf]
        %v2223 = vld [vmem:[%s474 + $0x18] sm:$0xf]
        %v2224 = vld [vmem:[%s474 + $0x1c] sm:$0xf]
        %v2225 = vld [vmem:[%s474 + $0x20] sm:$0xf]
        %v2226 = vld [vmem:[%s474 + $0x24] sm:$0xf]
        %v2227 = vld [vmem:[%s474 + $0x28] sm:$0xf]
        %v2228 = vld [vmem:[%s474 + $0x2c] sm:$0xf]
        %v2229 = vld [vmem:[%s474 + $0x30] sm:$0xf]
        %v2230 = vld [vmem:[%s474 + $0x34] sm:$0xf]
        %v2231 = vld [vmem:[%s474 + $0x38] sm:$0xf]
        %v2232 = vld [vmem:[%s474 + $0x3c] sm:$0xf]
        %v2233 = vld [vmem:[%s474 + $0x40] sm:$0xf]
        %v2234 = vld [vmem:[%s474 + $0x44] sm:$0xf]
        %v2235 = vld [vmem:[%s474 + $0x48] sm:$0xf]
        %v2236 = vld [vmem:[%s474 + $0x4c] sm:$0xf]
        %v2237 = vld [vmem:[%s474 + $0x50] sm:$0xf]
        %v2238 = vld [vmem:[%s474 + $0x54] sm:$0xf]
        %v2239 = vld [vmem:[%s474 + $0x58] sm:$0xf]
        %v2240 = vld [vmem:[%s474 + $0x5c] sm:$0xf]
        %v2265 = vunpack.c.l.b16 %v2217
        %v2266 = vunpack.c.l.b16 %v2218
        %v2267 = vunpack.c.l.b16 %v2219
        %v2268 = vunpack.c.l.b16 %v2220
        %v2269 = vunpack.c.l.b16 %v2221
        %v2270 = vunpack.c.l.b16 %v2222
        %v2271 = vunpack.c.l.b16 %v2223
        %v2272 = vunpack.c.l.b16 %v2224
        %v2273 = vunpack.c.l.b16 %v2225
        %v2274 = vunpack.c.l.b16 %v2226
        %v2275 = vunpack.c.l.b16 %v2227
        %v2276 = vunpack.c.l.b16 %v2228
        %v2277 = vunpack.c.l.b16 %v2229
        %v2278 = vunpack.c.l.b16 %v2230
        %v2279 = vunpack.c.l.b16 %v2231
        %v2280 = vunpack.c.l.b16 %v2232
        %v2281 = vunpack.c.l.b16 %v2233
        %v2282 = vunpack.c.l.b16 %v2234
        %v2283 = vunpack.c.l.b16 %v2235
        %v2284 = vunpack.c.l.b16 %v2236
        %v2285 = vunpack.c.l.b16 %v2237
        %v2286 = vunpack.c.l.b16 %v2238
        %v2287 = vunpack.c.l.b16 %v2239
        %v2288 = vunpack.c.l.b16 %v2240
        %v2289 = vpack.c.b16 %v2266, %v2265
        %v2290 = vpack.c.b16 %v2268, %v2267
        %v2291 = vpack.c.b16 %v2270, %v2269
        %v2292 = vpack.c.b16 %v2272, %v2271
        %v2293 = vpack.c.b16 %v2274, %v2273
        %v2294 = vpack.c.b16 %v2276, %v2275
        %v2295 = vpack.c.b16 %v2278, %v2277
        %v2296 = vpack.c.b16 %v2280, %v2279
        %v2297 = vpack.c.b16 %v2282, %v2281
        %v2298 = vpack.c.b16 %v2284, %v2283
        %v2299 = vpack.c.b16 %v2286, %v2285
        %v2300 = vpack.c.b16 %v2288, %v2287
        %v2314 = vsel %vm807, %v2216, 0
        %2316 = vmatprep.subr.bf16.mxu0 0
        %2317 = vmatpush1.bf16.msra.mxu0 %v2289
        %2318 = vmatprep.subr.bf16.mxu0 0
        %2319 = vmatpush1.bf16.msra.mxu0 %v2290
        %2320 = vmatprep.subr.bf16.mxu0 0
        %2321 = vmatpush1.bf16.msra.mxu0 %v2291
        %2322 = vmatprep.subr.bf16.mxu0 0
        %2323 = vmatpush1.bf16.msra.mxu0 %v2292
        %2324 = vmatprep.subr.bf16.mxu0 0
        %2325 = vmatpush1.bf16.msra.mxu0 %v2293
        %2326 = vmatprep.subr.bf16.mxu0 0
        %2327 = vmatpush1.bf16.msra.mxu0 %v2294
        %2328 = vmatprep.subr.bf16.mxu0 0
        %2329 = vmatpush1.bf16.msra.mxu0 %v2295
        %2330 = vmatprep.subr.bf16.mxu0 0
        %2331 = vmatpush1.bf16.msra.mxu0 %v2296
        %2332 = vmatprep.subr.bf16.mxu0 0
        %2333 = vmatpush1.bf16.msra.mxu0 %v2297
        %2334 = vmatprep.subr.bf16.mxu0 0
        %2335 = vmatpush1.bf16.msra.mxu0 %v2298
        %2336 = vmatprep.subr.bf16.mxu0 0
        %2337 = vmatpush1.bf16.msra.mxu0 %v2299
        %2338 = vmatprep.subr.bf16.mxu0 0
        %2339 = vmatpush1.bf16.msra.mxu0 %v2300
        %2340 = vmatprep.subr.bf16.mxu0 0
        %2341 = vmatpush1.bf16.msra.mxu0 0
        %2342 = vmatprep.subr.bf16.mxu0 0
        %2343 = vmatpush1.bf16.msra.mxu0 0
        %2344 = vmatprep.subr.bf16.mxu0 0
        %2345 = vmatpush1.bf16.msra.mxu0 0
        %2346 = vmatprep.subr.bf16.mxu0 0
        %2347 = vmatpush1.bf16.msra.mxu0 0
        %2348 = vmatprep.mubr.bf16.mxu0 %v2314
        %2349 = vmatmul.mubr.bf16.gmra.mrb[0].mxu0 %v2215
        %v2350 = vpop.f32.mrb[0].mxu0
        %v2351 = vadd.f32 0.0, %v2350
        %v2352 = vpop.f32.mrb[0].mxu0
        %v2353 = vpop.f32.mrb[0].mxu0
        %v2354 = vadd.f32 0.0, %v2353
        %v2355 = vpop.f32.mrb[0].mxu0
        %2356 = vdwg.mxu0
        %v2357 = vadd.f32 %v1972, %v2351
        %v2358 = vadd.f32 %v1973, %v2354
        %2359 = vst.msk [vmem:[#allocation2] sm:$0xff] %vm807, %v2357
        %2360 = vst.msk [vmem:[#allocation2 + $0x8] sm:$0xff] %vm807, %v2358
        %p2361 = scmp.eq.s32.totalorder %s25, 1
        // Predicated region
        $region69: #{llama2_t5_encoder_forward.1} parent=63 // pred_check
          %p2362 = pneg %p2361
        $region70: #{llama2_t5_encoder_forward.1} parent=63 // pred_check_branch
          %2364 = sbr.rel (%p2362) target = $region72
        $region71: #{llama2_t5_encoder_forward.1} parent=63 // pred_region
          %2365 = vst.msk [vmem:[#allocation3] sm:$0xff] %vm807, %v2357
          %2366 = vst.msk [vmem:[#allocation3 + $0x8] sm:$0xff] %vm807, %v2358
          %v2367 = vpack.c.bf16 %v2358, %v2357
          %v2368 = vld [vmem:[%s5] sm:$0xf]
          %v2369 = vld [vmem:[%s5 + $0x4] sm:$0xf]
          %v2370 = vld [vmem:[%s5 + $0x8] sm:$0xf]
          %v2371 = vld [vmem:[%s5 + $0xc] sm:$0xf]
          %v2372 = vld [vmem:[%s5 + $0x10] sm:$0xf]
          %v2373 = vld [vmem:[%s5 + $0x14] sm:$0xf]
          %v2374 = vld [vmem:[%s5 + $0x18] sm:$0xf]
          %v2375 = vld [vmem:[%s5 + $0x1c] sm:$0xf]
          %v2376 = vld [vmem:[%s5 + $0x20] sm:$0xf]
          %v2377 = vld [vmem:[%s5 + $0x24] sm:$0xf]
          %v2378 = vld [vmem:[%s5 + $0x28] sm:$0xf]
          %v2379 = vld [vmem:[%s5 + $0x2c] sm:$0xf]
          %v2380 = vld [vmem:[%s5 + $0x30] sm:$0xf]
          %v2381 = vld [vmem:[%s5 + $0x34] sm:$0xf]
          %v2382 = vld [vmem:[%s5 + $0x38] sm:$0xf]
          %v2383 = vld [vmem:[%s5 + $0x3c] sm:$0xf]
          %v2384 = vld [vmem:[%s5 + $0x40] sm:$0xf]
          %v2385 = vld [vmem:[%s5 + $0x44] sm:$0xf]
          %v2386 = vld [vmem:[%s5 + $0x48] sm:$0xf]
          %v2387 = vld [vmem:[%s5 + $0x4c] sm:$0xf]
          %v2388 = vld [vmem:[%s5 + $0x50] sm:$0xf]
          %v2389 = vld [vmem:[%s5 + $0x54] sm:$0xf]
          %v2390 = vld [vmem:[%s5 + $0x58] sm:$0xf]
          %v2391 = vld [vmem:[%s5 + $0x5c] sm:$0xf]
          %v2392 = vld [vmem:[%s5 + $0x60] sm:$0xf]
          %v2393 = vld [vmem:[%s5 + $0x64] sm:$0xf]
          %v2394 = vld [vmem:[%s5 + $0x68] sm:$0xf]
          %v2395 = vld [vmem:[%s5 + $0x6c] sm:$0xf]
          %v2396 = vld [vmem:[%s5 + $0x70] sm:$0xf]
          %v2397 = vld [vmem:[%s5 + $0x74] sm:$0xf]
          %v2398 = vld [vmem:[%s5 + $0x78] sm:$0xf]
          %v2399 = vld [vmem:[%s5 + $0x7c] sm:$0xf]
          %v2432 = vunpack.c.l.b16 %v2368
          %v2433 = vunpack.c.l.b16 %v2369
          %v2434 = vunpack.c.l.b16 %v2370
          %v2435 = vunpack.c.l.b16 %v2371
          %v2436 = vunpack.c.l.b16 %v2372
          %v2437 = vunpack.c.l.b16 %v2373
          %v2438 = vunpack.c.l.b16 %v2374
          %v2439 = vunpack.c.l.b16 %v2375
          %v2440 = vunpack.c.l.b16 %v2376
          %v2441 = vunpack.c.l.b16 %v2377
          %v2442 = vunpack.c.l.b16 %v2378
          %v2443 = vunpack.c.l.b16 %v2379
          %v2444 = vunpack.c.l.b16 %v2380
          %v2445 = vunpack.c.l.b16 %v2381
          %v2446 = vunpack.c.l.b16 %v2382
          %v2447 = vunpack.c.l.b16 %v2383
          %v2448 = vunpack.c.l.b16 %v2384
          %v2449 = vunpack.c.l.b16 %v2385
          %v2450 = vunpack.c.l.b16 %v2386
          %v2451 = vunpack.c.l.b16 %v2387
          %v2452 = vunpack.c.l.b16 %v2388
          %v2453 = vunpack.c.l.b16 %v2389
          %v2454 = vunpack.c.l.b16 %v2390
          %v2455 = vunpack.c.l.b16 %v2391
          %v2456 = vunpack.c.l.b16 %v2392
          %v2457 = vunpack.c.l.b16 %v2393
          %v2458 = vunpack.c.l.b16 %v2394
          %v2459 = vunpack.c.l.b16 %v2395
          %v2460 = vunpack.c.l.b16 %v2396
          %v2461 = vunpack.c.l.b16 %v2397
          %v2462 = vunpack.c.l.b16 %v2398
          %v2463 = vunpack.c.l.b16 %v2399
          %v2464 = vpack.c.b16 %v2433, %v2432
          %v2465 = vpack.c.b16 %v2435, %v2434
          %v2466 = vpack.c.b16 %v2437, %v2436
          %v2467 = vpack.c.b16 %v2439, %v2438
          %v2468 = vpack.c.b16 %v2441, %v2440
          %v2469 = vpack.c.b16 %v2443, %v2442
          %v2470 = vpack.c.b16 %v2445, %v2444
          %v2471 = vpack.c.b16 %v2447, %v2446
          %v2472 = vpack.c.b16 %v2449, %v2448
          %v2473 = vpack.c.b16 %v2451, %v2450
          %v2474 = vpack.c.b16 %v2453, %v2452
          %v2475 = vpack.c.b16 %v2455, %v2454
          %v2476 = vpack.c.b16 %v2457, %v2456
          %v2477 = vpack.c.b16 %v2459, %v2458
          %v2478 = vpack.c.b16 %v2461, %v2460
          %v2479 = vpack.c.b16 %v2463, %v2462
          %v2481 = vsel %vm807, %v2367, 0
          %v2484 = vsel %vm807, %v2464, 0
          %v2487 = vsel %vm807, %v2465, 0
          %v2490 = vsel %vm807, %v2466, 0
          %v2493 = vsel %vm807, %v2467, 0
          %v2496 = vsel %vm807, %v2468, 0
          %v2499 = vsel %vm807, %v2469, 0
          %v2502 = vsel %vm807, %v2470, 0
          %v2505 = vsel %vm807, %v2471, 0
          %v2508 = vsel %vm807, %v2472, 0
          %v2511 = vsel %vm807, %v2473, 0
          %v2514 = vsel %vm807, %v2474, 0
          %v2517 = vsel %vm807, %v2475, 0
          %v2520 = vsel %vm807, %v2476, 0
          %v2523 = vsel %vm807, %v2477, 0
          %v2526 = vsel %vm807, %v2478, 0
          %v2529 = vsel %vm807, %v2479, 0
          %2531 = vmatprep.subr.bf16.mxu0 0
          %2532 = vmatpush1.bf16.xpose.msra.mxu0 %v2484
          %2533 = vmatprep.subr.bf16.mxu0 0
          %2534 = vmatpush1.bf16.xpose.msra.mxu0 %v2487
          %2535 = vmatprep.subr.bf16.mxu0 0
          %2536 = vmatpush1.bf16.xpose.msra.mxu0 %v2490
          %2537 = vmatprep.subr.bf16.mxu0 0
          %2538 = vmatpush1.bf16.xpose.msra.mxu0 %v2493
          %2539 = vmatprep.subr.bf16.mxu0 0
          %2540 = vmatpush1.bf16.xpose.msra.mxu0 %v2496
          %2541 = vmatprep.subr.bf16.mxu0 0
          %2542 = vmatpush1.bf16.xpose.msra.mxu0 %v2499
          %2543 = vmatprep.subr.bf16.mxu0 0
          %2544 = vmatpush1.bf16.xpose.msra.mxu0 %v2502
          %2545 = vmatprep.subr.bf16.mxu0 0
          %2546 = vmatpush1.bf16.xpose.msra.mxu0 %v2505
          %2547 = vmatprep.subr.bf16.mxu0 0
          %2548 = vmatpush1.bf16.xpose.msra.mxu0 %v2508
          %2549 = vmatprep.subr.bf16.mxu0 0
          %2550 = vmatpush1.bf16.xpose.msra.mxu0 %v2511
          %2551 = vmatprep.subr.bf16.mxu0 0
          %2552 = vmatpush1.bf16.xpose.msra.mxu0 %v2514
          %2553 = vmatprep.subr.bf16.mxu0 0
          %2554 = vmatpush1.bf16.xpose.msra.mxu0 %v2517
          %2555 = vmatprep.subr.bf16.mxu0 0
          %2556 = vmatpush1.bf16.xpose.msra.mxu0 %v2520
          %2557 = vmatprep.subr.bf16.mxu0 0
          %2558 = vmatpush1.bf16.xpose.msra.mxu0 %v2523
          %2559 = vmatprep.subr.bf16.mxu0 0
          %2560 = vmatpush1.bf16.xpose.msra.mxu0 %v2526
          %2561 = vmatprep.subr.bf16.mxu0 0
          %2562 = vmatpush1.bf16.xpose.msra.mxu0 %v2529
          %2563 = vmatprep.mubr.bf16.mxu0 0
          %2564 = vmatmul.mubr.bf16.gmra.mrb[0].mxu0 %v2481
          %v2565 = vpop.f32.mrb[0].mxu0
          %v2566 = vadd.f32 0.0, %v2565
          %v2567 = vpop.f32.mrb[0].mxu0
          %v2568 = vadd.f32 0.0, %v2567
          %v2569 = vpop.f32.mrb[0].mxu0
          %v2570 = vadd.f32 0.0, %v2569
          %v2571 = vpop.f32.mrb[0].mxu0
          %v2572 = vadd.f32 0.0, %v2571
          %2573 = vdwg.mxu0
          %2574 = vst [vmem:[%s12] sm:$0xff] %v2566
          %2575 = vst [vmem:[%s12 + $0x8] sm:$0xff] %v2568
          %2576 = vst [vmem:[%s12 + $0x10] sm:$0xff] %v2570
          %2577 = vst [vmem:[%s12 + $0x18] sm:$0xff] %v2572
        $region72: #{llama2_t5_encoder_forward.1} parent=63 // pred_fallthru
          _
        // Predicated region
        $region73: #{llama2_t5_encoder_forward.1} parent=63 // pred_check
          %p2578 = pneg %p294
        $region74: #{llama2_t5_encoder_forward.1} parent=63 // pred_check_branch
          %2580 = sbr.rel (%p2578) target = $region76
        $region75: #{llama2_t5_encoder_forward.1} parent=63 // pred_region
          %s2582 = ssub.s32 256, 256
          %2583 = vsyncadd [#allocation4], %s2582
          %s2584 = sshll.u32 [#allocation3], 4
          %s2585 = int_to_ptr.vmem [resolvable:$true] %s2584
          %2590 = dma.vmem_to_hbm [thread:$0]  %s2585, 256, %s11, [#allocation4], 128, 128, 8
        $region76: #{llama2_t5_encoder_forward.1} parent=63 // pred_fallthru
          _
        // Predicated region
        $region77: #{llama2_t5_encoder_forward.1} parent=63 // pred_check
          %p2591 = pneg %p315
        $region78: #{llama2_t5_encoder_forward.1} parent=63 // pred_check_branch
          %2593 = sbr.rel (%p2591) target = $region80
        $region79: #{llama2_t5_encoder_forward.1} parent=63 // pred_region
          _
        $region80: #{llama2_t5_encoder_forward.1} parent=63 // pred_fallthru
          _
        // Predicated region
        $region81: #{llama2_t5_encoder_forward.1} parent=63 // pred_check
          %p2594 = pneg %p294
        $region82: #{llama2_t5_encoder_forward.1} parent=63 // pred_check_branch
          %2596 = sbr.rel (%p2594) target = $region84
        $region83: #{llama2_t5_encoder_forward.1} parent=63 // pred_region
          %2597 = dma.done [#allocation4], 256
        $region84: #{llama2_t5_encoder_forward.1} parent=63 // pred_fallthru
          _
        // Predicated region
        $region85: #{llama2_t5_encoder_forward.1} parent=63 // pred_check
          %p2598 = pneg %p315
        $region86: #{llama2_t5_encoder_forward.1} parent=63 // pred_check_branch
          %2600 = sbr.rel (%p2598) target = $region88
        $region87: #{llama2_t5_encoder_forward.1} parent=63 // pred_region
          _
        $region88: #{llama2_t5_encoder_forward.1} parent=63 // pred_fallthru
          _
      $region64: #{llama2_t5_encoder_forward.1} parent=5 // pred_fallthru
        _
      %p2601 = scmp.le.s32.totalorder 2, %s20
      // Predicated region
      $region89: #{llama2_t5_encoder_forward.1} parent=5 // pred_check
        %p2602 = pneg %p2601
      $region90: #{llama2_t5_encoder_forward.1} parent=5 // pred_check_branch
        %2604 = sbr.rel (%p2602) target = $region92
      $region91: #{llama2_t5_encoder_forward.1} parent=5 // pred_region
        %s2605 = ssub.s32 %s20, 2
      $region92: #{llama2_t5_encoder_forward.1} parent=5 // pred_fallthru
        _
    $region6: #{llama2_t5_encoder_forward.1} parent=1 // loop_footer
      %s24 = sadd.s32 1, %s20
    $region7: #{llama2_t5_encoder_forward.1} parent=1 // loop_footer_branch
      %19 = sbr.rel target = $region3
    $region8: #{llama2_t5_encoder_forward.1} parent=1 // loop_exit
      _
    %2606 = vsyncpa [#allocation4], 1
    %s2607 = scalar_lea.sflag [#allocation4], 1
    %2608 = vsyncpa %s2607, 1

</llo_original>
